<compile_context>
chip_gen: v7x
topology: tpu7x:2x2x1
jax: 0.10.0
libtpu: 0.0.40
codegen_flags: <defaults>
</compile_context>

<pallas_src>
import functools
import math

import jax
import jax.numpy as jnp
from jax import lax
from jax.experimental import pallas as pl
from jax.experimental.pallas import tpu as pltpu

EPS = 1e-5
_LANE = 128
_PAD_TOP = 8          # sublane-aligned top halo offset inside the VMEM scratch


def _basic_block_kernel(N, H, W, C,
                        x_ref, w1_ref, w2_ref, g1_ref, b1_ref, g2_ref, b2_ref,
                        fold_ref, bcast_ref, out_ref, xpad_ref):
    """Fused conv3x3+bn1+relu -> conv3x3+bn2 -> +residual -> relu (all in VMEM).

    x_ref    : (N*H, W*C)            lane-dense NHWC activations (W*C = k*128)
    w?_ref   : (3*W*C, W*C)          stacked banded conv weights (kh along rows)
    g?,b?    : (1, C)                BN gamma / beta
    fold_ref : (W*C, C)              per-channel fold matrix (sum over W)
    bcast_ref: (C, W*C)              per-channel broadcast matrix (fold.T)
    out_ref  : (N*H, W*C)
    xpad_ref : (N, H+2*_PAD_TOP, W*C) VMEM scratch: H-halo buffer for both convs
    """
    WC = W * C
    inv_m = 1.0 / float(N * H * W)

    fold = fold_ref[...]            # (W*C, C)
    bcast = bcast_ref[...]          # (C, W*C)

    # Zero only the halo regions: two sublane-aligned 8-row chunks per image
    # (instead of the whole scratch).  Interior rows are overwritten before
    # each conv, so these zeros persist for both convolutions.
    xpad_ref[:, 0:_PAD_TOP, :] = jnp.zeros((N, _PAD_TOP, WC), jnp.float32)
    xpad_ref[:, _PAD_TOP + H:2 * _PAD_TOP + H, :] = (
        jnp.zeros((N, _PAD_TOP, WC), jnp.float32))

    def conv3x3_bn(act, w_ref, gamma, beta):
        # act: (N*H, W*C) unpadded lane-dense activations.
        # Stage into the H-halo scratch (sublane-aligned store at row _PAD_TOP).
        xpad_ref[:, _PAD_TOP:_PAD_TOP + H, :] = act.reshape(N, H, WC)

        # 3x3 conv == ONE MXU matmul: the three kh-tap row-shifted views are
        # concatenated along lanes (K = 3*W*C) against the stacked banded
        # weights; kw taps + SAME W-padding are encoded inside each band.
        taps = [
            xpad_ref[:, _PAD_TOP - 1 + kh:_PAD_TOP - 1 + kh + H, :]
            .reshape(N * H, WC)
            for kh in range(3)
        ]
        patch = jnp.concatenate(taps, axis=-1)                     # (N*H, 3*W*C)
        acc = jnp.dot(patch, w_ref[...], preferred_element_type=jnp.float32)

        # BatchNorm with batch statistics (training-mode forward), centered
        # two-pass form for numerical robustness; fold/broadcast over W are
        # tiny constant matmuls so the reduction stays per-channel.
        col_s = jnp.sum(acc, axis=0, keepdims=True)                # (1, W*C)
        mean = jnp.dot(col_s, fold,
                       preferred_element_type=jnp.float32) * inv_m  # (1, C)
        mean_b = jnp.dot(mean, bcast,
                         preferred_element_type=jnp.float32)        # (1, W*C)
        cent = acc - mean_b
        col_ss = jnp.sum(cent * cent, axis=0, keepdims=True)        # (1, W*C)
        var = jnp.dot(col_ss, fold,
                      preferred_element_type=jnp.float32) * inv_m   # (1, C)
        scale = gamma * lax.rsqrt(var + EPS)                        # (1, C)
        scale_b = jnp.dot(scale, bcast, preferred_element_type=jnp.float32)
        beta_b = jnp.dot(beta, bcast, preferred_element_type=jnp.float32)
        return cent * scale_b + beta_b                              # (N*H, W*C)

    h1 = jnp.maximum(conv3x3_bn(x_ref[...], w1_ref, g1_ref[...], b1_ref[...]),
                     0.0)
    h2 = conv3x3_bn(h1, w2_ref, g2_ref[...], b2_ref[...])
    # Residual is re-read here (not held live across both convs).
    out_ref[...] = jnp.maximum(h2 + x_ref[...], 0.0)


def _banded_conv_weights(w_hwio, width):
    """(3,3,Cin,Cout) HWIO conv weight -> (3*W*Cin, W*Cout) stacked banded mats.

    Rows [kh*W*Cin, (kh+1)*W*Cin) hold the band for tap kh:
    B_kh[w_in*Cin+ci, w_out*Cout+co] = w[kh, kw, ci, co] with w_in = w_out+kw-1;
    SAME padding along W is expressed by band truncation.  Host-side, tiny."""
    mats = []
    for kh in range(3):
        b = None
        for kw in range(3):
            shift = jnp.eye(width, k=1 - kw, dtype=jnp.float32)  # w_in = w_out+(kw-1)
            blk = jnp.kron(shift, w_hwio[kh, kw])
            b = blk if b is None else b + blk
        mats.append(b)
    return jnp.concatenate(mats, axis=0)


@jax.jit
def basic_block(x_nchw, params):
    """BasicBlock forward.  x_nchw: (N, C, H, W) float32 (PyTorch layout)."""
    w1, g1, b1, w2, g2, b2 = params
    N, C, H, W = x_nchw.shape
    assert H % 8 == 0, "H must be a multiple of 8 (sublane-aligned halo staging)"

    # Pad channels so W*C_pad is a multiple of 128: full-lane-width tiles,
    # unmasked output stores, deeper MXU contraction.  Padded channels carry
    # exact zeros through conv/BN/relu/residual and are stripped afterwards.
    c_unit = _LANE // math.gcd(_LANE, W)
    C_pad = ((C + c_unit - 1) // c_unit) * c_unit
    pc = C_pad - C
    WC = W * C_pad

    # NCHW -> NHWC -> lane-dense (N*H, W*C_pad).
    x_nhwc = jnp.transpose(x_nchw, (0, 2, 3, 1))
    x_nhwc = jnp.pad(x_nhwc, ((0, 0), (0, 0), (0, 0), (0, pc)))
    x_flat = x_nhwc.reshape(N * H, WC)

    def pad_w(w):
        return jnp.pad(w, ((0, 0), (0, 0), (0, pc), (0, pc)))

    wb1 = _banded_conv_weights(pad_w(w1), W)                 # (3*W*C_pad, W*C_pad)
    wb2 = _banded_conv_weights(pad_w(w2), W)
    g1p = jnp.pad(g1, ((0, 0), (0, pc)), constant_values=1.0)
    g2p = jnp.pad(g2, ((0, 0), (0, pc)), constant_values=1.0)
    b1p = jnp.pad(b1, ((0, 0), (0, pc)))
    b2p = jnp.pad(b2, ((0, 0), (0, pc)))

    fold = jnp.tile(jnp.eye(C_pad, dtype=jnp.float32), (W, 1))  # (W*C_pad, C_pad)
    bcast = fold.T                                              # (C_pad, W*C_pad)

    kernel = functools.partial(_basic_block_kernel, N, H, W, C_pad)

    out_flat = pl.pallas_call(
        kernel,
        out_shape=jax.ShapeDtypeStruct((N * H, WC), jnp.float32),
        in_specs=[pl.BlockSpec(memory_space=pltpu.MemorySpace.VMEM)] * 9,
        out_specs=pl.BlockSpec(memory_space=pltpu.MemorySpace.VMEM),
        scratch_shapes=[pltpu.VMEM((N, H + 2 * _PAD_TOP, WC), jnp.float32)],
        compiler_params=pltpu.CompilerParams(
            vmem_limit_bytes=32 * 1024 * 1024),
    )(x_flat, wb1, wb2, g1p, b1p, g2p, b2p, fold, bcast)

    out = out_flat.reshape(N, H, W, C_pad)[..., :C]
    return jnp.transpose(out, (0, 3, 1, 2))


# ---------------- pure-JAX reference (for correctness check) ----------------
def _ref_conv_bn(x_nhwc, w, gamma, beta):
    y = lax.conv_general_dilated(
        x_nhwc, w, window_strides=(1, 1), padding='SAME',
        dimension_numbers=('NHWC', 'HWIO', 'NHWC'))
    mean = jnp.mean(y, axis=(0, 1, 2), keepdims=True)
    var = jnp.mean(jnp.square(y - mean), axis=(0, 1, 2), keepdims=True)
    return (y - mean) * lax.rsqrt(var + EPS) * gamma.reshape(1, 1, 1, -1) \
        + beta.reshape(1, 1, 1, -1)


def basic_block_ref(x_nchw, params):
    w1, g1, b1, w2, g2, b2 = params
    x = jnp.transpose(x_nchw, (0, 2, 3, 1))
    out = jnp.maximum(_ref_conv_bn(x, w1, g1, b1), 0.0)
    out = _ref_conv_bn(out, w2, g2, b2)
    out = jnp.maximum(out + x, 0.0)
    return jnp.transpose(out, (0, 3, 1, 2))


if __name__ == "__main__":
    N, C, H, W = 2, 4, 16, 16          # inplanes = planes = 4, stride = 1
    key = jax.random.PRNGKey(0)
    kx, k1, k2 = jax.random.split(key, 3)

    x = jax.random.normal(kx, (N, C, H, W), jnp.float32)

    # conv weights in HWIO layout (3, 3, Cin, Cout); BN gamma=1, beta=0 (default init)
    w1 = 0.1 * jax.random.normal(k1, (3, 3, C, C), jnp.float32)
    w2 = 0.1 * jax.random.normal(k2, (3, 3, C, C), jnp.float32)
    g1 = jnp.ones((1, C), jnp.float32)
    b1 = jnp.zeros((1, C), jnp.float32)
    g2 = jnp.ones((1, C), jnp.float32)
    b2 = jnp.zeros((1, C), jnp.float32)
    params = (w1, g1, b1, w2, g2, b2)

    out = jax.block_until_ready(basic_block(x, params))
    ref = jax.block_until_ready(basic_block_ref(x, params))

    assert out.shape == (N, C, H, W)
    assert jnp.allclose(out, ref, atol=2e-4, rtol=2e-4), "mismatch vs reference"
    print("KERNEL_OK")
</pallas_src>

<mosaic_0001>
module attributes {stable_mosaic.version = 11 : i64} {
  func.func @_basic_block_kernel(%arg0: memref<32x128xf32, #tpu.memory_space<vmem>>, %arg1: memref<384x128xf32, #tpu.memory_space<vmem>>, %arg2: memref<384x128xf32, #tpu.memory_space<vmem>>, %arg3: memref<1x8xf32, #tpu.memory_space<vmem>>, %arg4: memref<1x8xf32, #tpu.memory_space<vmem>>, %arg5: memref<1x8xf32, #tpu.memory_space<vmem>>, %arg6: memref<1x8xf32, #tpu.memory_space<vmem>>, %arg7: memref<128x8xf32, #tpu.memory_space<vmem>>, %arg8: memref<8x128xf32, #tpu.memory_space<vmem>>, %arg9: memref<32x128xf32, #tpu.memory_space<vmem>>, %arg10: memref<2x32x128xf32, #tpu.memory_space<vmem>>) attributes {dimension_semantics = [], scalar_prefetch = 0 : i64, scratch_operands = 1 : i64, tpu.core_type = #tpu.core_type<tc>} {
    %c0 = arith.constant 0 : index
    %c0_0 = arith.constant 0 : index
    %0 = vector.load %arg7[%c0, %c0_0] : memref<128x8xf32, #tpu.memory_space<vmem>>, vector<128x8xf32>
    %c0_1 = arith.constant 0 : index
    %c0_2 = arith.constant 0 : index
    %1 = vector.load %arg8[%c0_1, %c0_2] : memref<8x128xf32, #tpu.memory_space<vmem>>, vector<8x128xf32>
    %cst = arith.constant 0.000000e+00 : f32
    %2 = vector.broadcast %cst : f32 to vector<2x8x128xf32>
    %c0_3 = arith.constant 0 : index
    %c0_4 = arith.constant 0 : index
    %c0_5 = arith.constant 0 : index
    %3 = vector.load %arg10[%c0_3, %c0_4, %c0_5] : memref<2x32x128xf32, #tpu.memory_space<vmem>>, vector<2x8x128xf32>
    tpu.vector_store %arg10[%c0_3, %c0_4, %c0_5], %2 {strides = array<i32>} : memref<2x32x128xf32, #tpu.memory_space<vmem>>, vector<2x8x128xf32>,
    %cst_6 = arith.constant 0.000000e+00 : f32
    %4 = vector.broadcast %cst_6 : f32 to vector<2x8x128xf32>
    %c0_7 = arith.constant 0 : index
    %c24 = arith.constant 24 : index
    %c0_8 = arith.constant 0 : index
    %5 = vector.load %arg10[%c0_7, %c24, %c0_8] : memref<2x32x128xf32, #tpu.memory_space<vmem>>, vector<2x8x128xf32>
    tpu.vector_store %arg10[%c0_7, %c24, %c0_8], %4 {strides = array<i32>} : memref<2x32x128xf32, #tpu.memory_space<vmem>>, vector<2x8x128xf32>,
    %c0_9 = arith.constant 0 : index
    %c0_10 = arith.constant 0 : index
    %6 = vector.load %arg0[%c0_9, %c0_10] : memref<32x128xf32, #tpu.memory_space<vmem>>, vector<32x128xf32>
    %c0_11 = arith.constant 0 : index
    %c0_12 = arith.constant 0 : index
    %7 = vector.load %arg3[%c0_11, %c0_12] : memref<1x8xf32, #tpu.memory_space<vmem>>, vector<1x8xf32>
    %c0_13 = arith.constant 0 : index
    %c0_14 = arith.constant 0 : index
    %8 = vector.load %arg4[%c0_13, %c0_14] : memref<1x8xf32, #tpu.memory_space<vmem>>, vector<1x8xf32>
    %9 = vector.shape_cast %6 : vector<32x128xf32> to vector<2x16x128xf32>
    %c0_15 = arith.constant 0 : index
    %c8 = arith.constant 8 : index
    %c0_16 = arith.constant 0 : index
    %10 = vector.load %arg10[%c0_15, %c8, %c0_16] : memref<2x32x128xf32, #tpu.memory_space<vmem>>, vector<2x16x128xf32>
    tpu.vector_store %arg10[%c0_15, %c8, %c0_16], %9 {strides = array<i32>} : memref<2x32x128xf32, #tpu.memory_space<vmem>>, vector<2x16x128xf32>,
    %c0_17 = arith.constant 0 : index
    %c7 = arith.constant 7 : index
    %c0_18 = arith.constant 0 : index
    %11 = vector.load %arg10[%c0_17, %c7, %c0_18] : memref<2x32x128xf32, #tpu.memory_space<vmem>>, vector<2x16x128xf32>
    %12 = vector.shape_cast %11 : vector<2x16x128xf32> to vector<32x128xf32>
    %c0_19 = arith.constant 0 : index
    %c8_20 = arith.constant 8 : index
    %c0_21 = arith.constant 0 : index
    %13 = vector.load %arg10[%c0_19, %c8_20, %c0_21] : memref<2x32x128xf32, #tpu.memory_space<vmem>>, vector<2x16x128xf32>
    %14 = vector.shape_cast %13 : vector<2x16x128xf32> to vector<32x128xf32>
    %c0_22 = arith.constant 0 : index
    %c9 = arith.constant 9 : index
    %c0_23 = arith.constant 0 : index
    %15 = vector.load %arg10[%c0_22, %c9, %c0_23] : memref<2x32x128xf32, #tpu.memory_space<vmem>>, vector<2x16x128xf32>
    %16 = vector.shape_cast %15 : vector<2x16x128xf32> to vector<32x128xf32>
    %17 = tpu.concatenate %12, %14, %16 in 1 : vector<32x128xf32>, vector<32x128xf32>, vector<32x128xf32> -> vector<32x384xf32>
    %c0_24 = arith.constant 0 : index
    %c0_25 = arith.constant 0 : index
    %18 = vector.load %arg1[%c0_24, %c0_25] : memref<384x128xf32, #tpu.memory_space<vmem>>, vector<384x128xf32>
    %cst_26 = arith.constant dense<0.000000e+00> : vector<32x128xf32>
    %19 = tpu.matmul %17, %18, %cst_26 {dimension_numbers = #tpu.dot_dimension_numbers<[1], [0], [0], [1], [0, 0, 1, 1], [], []>} : vector<32x384xf32>, vector<384x128xf32>, vector<32x128xf32> -> vector<32x128xf32>
    %cst_27 = arith.constant dense<0.000000e+00> : vector<128xf32>
    %20 = vector.multi_reduction <add>, %19, %cst_27 [0] : vector<32x128xf32> to vector<128xf32>
    %21 = vector.shape_cast %20 : vector<128xf32> to vector<1x128xf32>
    %cst_28 = arith.constant dense<0.000000e+00> : vector<1x8xf32>
    %22 = tpu.matmul %21, %0, %cst_28 {dimension_numbers = #tpu.dot_dimension_numbers<[1], [0], [0], [1], [0, 0, 1, 1], [], []>} : vector<1x128xf32>, vector<128x8xf32>, vector<1x8xf32> -> vector<1x8xf32>
    %cst_29 = arith.constant 0.001953125 : f32
    %23 = vector.broadcast %cst_29 : f32 to vector<1x8xf32>
    %24 = arith.mulf %22, %23 : vector<1x8xf32>
    %cst_30 = arith.constant dense<0.000000e+00> : vector<1x128xf32>
    %25 = tpu.matmul %24, %1, %cst_30 {dimension_numbers = #tpu.dot_dimension_numbers<[1], [0], [0], [1], [0, 0, 1, 1], [], []>} : vector<1x8xf32>, vector<8x128xf32>, vector<1x128xf32> -> vector<1x128xf32>
    %26 = vector.broadcast %25 : vector<1x128xf32> to vector<32x128xf32>
    %27 = arith.subf %19, %26 : vector<32x128xf32>
    %28 = arith.mulf %27, %27 : vector<32x128xf32>
    %cst_31 = arith.constant dense<0.000000e+00> : vector<128xf32>
    %29 = vector.multi_reduction <add>, %28, %cst_31 [0] : vector<32x128xf32> to vector<128xf32>
    %30 = vector.shape_cast %29 : vector<128xf32> to vector<1x128xf32>
    %cst_32 = arith.constant dense<0.000000e+00> : vector<1x8xf32>
    %31 = tpu.matmul %30, %0, %cst_32 {dimension_numbers = #tpu.dot_dimension_numbers<[1], [0], [0], [1], [0, 0, 1, 1], [], []>} : vector<1x128xf32>, vector<128x8xf32>, vector<1x8xf32> -> vector<1x8xf32>
    %cst_33 = arith.constant 0.001953125 : f32
    %32 = vector.broadcast %cst_33 : f32 to vector<1x8xf32>
    %33 = arith.mulf %31, %32 : vector<1x8xf32>
    %cst_34 = arith.constant 9.99999974E-6 : f32
    %34 = vector.broadcast %cst_34 : f32 to vector<1x8xf32>
    %35 = arith.addf %33, %34 : vector<1x8xf32>
    %36 = math.rsqrt %35 : vector<1x8xf32>
    %37 = arith.mulf %7, %36 : vector<1x8xf32>
    %cst_35 = arith.constant dense<0.000000e+00> : vector<1x128xf32>
    %38 = tpu.matmul %37, %1, %cst_35 {dimension_numbers = #tpu.dot_dimension_numbers<[1], [0], [0], [1], [0, 0, 1, 1], [], []>} : vector<1x8xf32>, vector<8x128xf32>, vector<1x128xf32> -> vector<1x128xf32>
    %cst_36 = arith.constant dense<0.000000e+00> : vector<1x128xf32>
    %39 = tpu.matmul %8, %1, %cst_36 {dimension_numbers = #tpu.dot_dimension_numbers<[1], [0], [0], [1], [0, 0, 1, 1], [], []>} : vector<1x8xf32>, vector<8x128xf32>, vector<1x128xf32> -> vector<1x128xf32>
    %40 = vector.broadcast %38 : vector<1x128xf32> to vector<32x128xf32>
    %41 = arith.mulf %27, %40 : vector<32x128xf32>
    %42 = vector.broadcast %39 : vector<1x128xf32> to vector<32x128xf32>
    %43 = arith.addf %41, %42 : vector<32x128xf32>
    %cst_37 = arith.constant 0.000000e+00 : f32
    %44 = vector.broadcast %cst_37 : f32 to vector<32x128xf32>
    %45 = arith.maximumf %43, %44 : vector<32x128xf32>
    %c0_38 = arith.constant 0 : index
    %c0_39 = arith.constant 0 : index
    %46 = vector.load %arg5[%c0_38, %c0_39] : memref<1x8xf32, #tpu.memory_space<vmem>>, vector<1x8xf32>
    %c0_40 = arith.constant 0 : index
    %c0_41 = arith.constant 0 : index
    %47 = vector.load %arg6[%c0_40, %c0_41] : memref<1x8xf32, #tpu.memory_space<vmem>>, vector<1x8xf32>
    %48 = vector.shape_cast %45 : vector<32x128xf32> to vector<2x16x128xf32>
    %c0_42 = arith.constant 0 : index
    %c8_43 = arith.constant 8 : index
    %c0_44 = arith.constant 0 : index
    %49 = vector.load %arg10[%c0_42, %c8_43, %c0_44] : memref<2x32x128xf32, #tpu.memory_space<vmem>>, vector<2x16x128xf32>
    tpu.vector_store %arg10[%c0_42, %c8_43, %c0_44], %48 {strides = array<i32>} : memref<2x32x128xf32, #tpu.memory_space<vmem>>, vector<2x16x128xf32>,
    %c0_45 = arith.constant 0 : index
    %c7_46 = arith.constant 7 : index
    %c0_47 = arith.constant 0 : index
    %50 = vector.load %arg10[%c0_45, %c7_46, %c0_47] : memref<2x32x128xf32, #tpu.memory_space<vmem>>, vector<2x16x128xf32>
    %51 = vector.shape_cast %50 : vector<2x16x128xf32> to vector<32x128xf32>
    %c0_48 = arith.constant 0 : index
    %c8_49 = arith.constant 8 : index
    %c0_50 = arith.constant 0 : index
    %52 = vector.load %arg10[%c0_48, %c8_49, %c0_50] : memref<2x32x128xf32, #tpu.memory_space<vmem>>, vector<2x16x128xf32>
    %53 = vector.shape_cast %52 : vector<2x16x128xf32> to vector<32x128xf32>
    %c0_51 = arith.constant 0 : index
    %c9_52 = arith.constant 9 : index
    %c0_53 = arith.constant 0 : index
    %54 = vector.load %arg10[%c0_51, %c9_52, %c0_53] : memref<2x32x128xf32, #tpu.memory_space<vmem>>, vector<2x16x128xf32>
    %55 = vector.shape_cast %54 : vector<2x16x128xf32> to vector<32x128xf32>
    %56 = tpu.concatenate %51, %53, %55 in 1 : vector<32x128xf32>, vector<32x128xf32>, vector<32x128xf32> -> vector<32x384xf32>
    %c0_54 = arith.constant 0 : index
    %c0_55 = arith.constant 0 : index
    %57 = vector.load %arg2[%c0_54, %c0_55] : memref<384x128xf32, #tpu.memory_space<vmem>>, vector<384x128xf32>
    %cst_56 = arith.constant dense<0.000000e+00> : vector<32x128xf32>
    %58 = tpu.matmul %56, %57, %cst_56 {dimension_numbers = #tpu.dot_dimension_numbers<[1], [0], [0], [1], [0, 0, 1, 1], [], []>} : vector<32x384xf32>, vector<384x128xf32>, vector<32x128xf32> -> vector<32x128xf32>
    %cst_57 = arith.constant dense<0.000000e+00> : vector<128xf32>
    %59 = vector.multi_reduction <add>, %58, %cst_57 [0] : vector<32x128xf32> to vector<128xf32>
    %60 = vector.shape_cast %59 : vector<128xf32> to vector<1x128xf32>
    %cst_58 = arith.constant dense<0.000000e+00> : vector<1x8xf32>
    %61 = tpu.matmul %60, %0, %cst_58 {dimension_numbers = #tpu.dot_dimension_numbers<[1], [0], [0], [1], [0, 0, 1, 1], [], []>} : vector<1x128xf32>, vector<128x8xf32>, vector<1x8xf32> -> vector<1x8xf32>
    %cst_59 = arith.constant 0.001953125 : f32
    %62 = vector.broadcast %cst_59 : f32 to vector<1x8xf32>
    %63 = arith.mulf %61, %62 : vector<1x8xf32>
    %cst_60 = arith.constant dense<0.000000e+00> : vector<1x128xf32>
    %64 = tpu.matmul %63, %1, %cst_60 {dimension_numbers = #tpu.dot_dimension_numbers<[1], [0], [0], [1], [0, 0, 1, 1], [], []>} : vector<1x8xf32>, vector<8x128xf32>, vector<1x128xf32> -> vector<1x128xf32>
    %65 = vector.broadcast %64 : vector<1x128xf32> to vector<32x128xf32>
    %66 = arith.subf %58, %65 : vector<32x128xf32>
    %67 = arith.mulf %66, %66 : vector<32x128xf32>
    %cst_61 = arith.constant dense<0.000000e+00> : vector<128xf32>
    %68 = vector.multi_reduction <add>, %67, %cst_61 [0] : vector<32x128xf32> to vector<128xf32>
    %69 = vector.shape_cast %68 : vector<128xf32> to vector<1x128xf32>
    %cst_62 = arith.constant dense<0.000000e+00> : vector<1x8xf32>
    %70 = tpu.matmul %69, %0, %cst_62 {dimension_numbers = #tpu.dot_dimension_numbers<[1], [0], [0], [1], [0, 0, 1, 1], [], []>} : vector<1x128xf32>, vector<128x8xf32>, vector<1x8xf32> -> vector<1x8xf32>
    %cst_63 = arith.constant 0.001953125 : f32
    %71 = vector.broadcast %cst_63 : f32 to vector<1x8xf32>
    %72 = arith.mulf %70, %71 : vector<1x8xf32>
    %cst_64 = arith.constant 9.99999974E-6 : f32
    %73 = vector.broadcast %cst_64 : f32 to vector<1x8xf32>
    %74 = arith.addf %72, %73 : vector<1x8xf32>
    %75 = math.rsqrt %74 : vector<1x8xf32>
    %76 = arith.mulf %46, %75 : vector<1x8xf32>
    %cst_65 = arith.constant dense<0.000000e+00> : vector<1x128xf32>
    %77 = tpu.matmul %76, %1, %cst_65 {dimension_numbers = #tpu.dot_dimension_numbers<[1], [0], [0], [1], [0, 0, 1, 1], [], []>} : vector<1x8xf32>, vector<8x128xf32>, vector<1x128xf32> -> vector<1x128xf32>
    %cst_66 = arith.constant dense<0.000000e+00> : vector<1x128xf32>
    %78 = tpu.matmul %47, %1, %cst_66 {dimension_numbers = #tpu.dot_dimension_numbers<[1], [0], [0], [1], [0, 0, 1, 1], [], []>} : vector<1x8xf32>, vector<8x128xf32>, vector<1x128xf32> -> vector<1x128xf32>
    %79 = vector.broadcast %77 : vector<1x128xf32> to vector<32x128xf32>
    %80 = arith.mulf %66, %79 : vector<32x128xf32>
    %81 = vector.broadcast %78 : vector<1x128xf32> to vector<32x128xf32>
    %82 = arith.addf %80, %81 : vector<32x128xf32>
    %c0_67 = arith.constant 0 : index
    %c0_68 = arith.constant 0 : index
    %83 = vector.load %arg0[%c0_67, %c0_68] : memref<32x128xf32, #tpu.memory_space<vmem>>, vector<32x128xf32>
    %84 = arith.addf %82, %83 : vector<32x128xf32>
    %cst_69 = arith.constant 0.000000e+00 : f32
    %85 = vector.broadcast %cst_69 : f32 to vector<32x128xf32>
    %86 = arith.maximumf %84, %85 : vector<32x128xf32>
    %c0_70 = arith.constant 0 : index
    %c0_71 = arith.constant 0 : index
    %87 = vector.load %arg9[%c0_70, %c0_71] : memref<32x128xf32, #tpu.memory_space<vmem>>, vector<32x128xf32>
    tpu.vector_store %arg9[%c0_70, %c0_71], %86 {strides = array<i32>} : memref<32x128xf32, #tpu.memory_space<vmem>>, vector<32x128xf32>,
    return
  }
}

</mosaic_0001>

<llo_original>
// kernel: tile.9
$region0: #{tile.9}
  %s0 = inlined_call_operand.vmem [shape: f32[16,8,8], index: 0, kind: input, shape index: {}]
  %s1 = inlined_call_operand.vmem [shape: f32[128,8], index: 1, kind: output, shape index: {}]
  %s2 = smov 3
  %v3 = vld [vmem:[%s0] ss:$16 sm:%s2]
  %s4 = smov 12
  %v5 = vld [vmem:[%s0] ss:$16 sm:%s4]
  %vm6 = vcmask 1043458
  %v7 = vsel %vm6, %v5, %v3
  %s8 = smov 48
  %v9 = vld [vmem:[%s0] ss:$16 sm:%s8]
  %vm10 = vcmask 1045508
  %v11 = vsel %vm10, %v9, %v7
  %s12 = smov 192
  %v13 = vld [vmem:[%s0] ss:$16 sm:%s12]
  %vm14 = vcmask 1047558
  %v15 = vsel %vm14, %v13, %v11
  %vm16 = vcmask 64512
  %17 = vst.msk [vmem:[%s1] sm:$0xff] %vm16, %v15
  %s18 = scalar_lea.vmem %s0, 15
  %s19 = smov 3
  %v20 = vld [vmem:[%s18] ss:$16 sm:%s19]
  %s21 = scalar_lea.vmem %s0, 15
  %s22 = smov 12
  %v23 = vld [vmem:[%s21] ss:$16 sm:%s22]
  %vm24 = vcmask 1043458
  %v25 = vsel %vm24, %v23, %v20
  %s26 = scalar_lea.vmem %s0, 15
  %s27 = smov 48
  %v28 = vld [vmem:[%s26] ss:$16 sm:%s27]
  %vm29 = vcmask 1045508
  %v30 = vsel %vm29, %v28, %v25
  %s31 = scalar_lea.vmem %s0, 15
  %s32 = smov 192
  %v33 = vld [vmem:[%s31] ss:$16 sm:%s32]
  %vm34 = vcmask 1047558
  %v35 = vsel %vm34, %v33, %v30
  %36 = vrot.lane.b32.xlu0 %v35, 120
  %v37 = vpop.permute.xlu0 %36
  %vm38 = vcmask 1048512
  %39 = vst.msk [vmem:[%s1] sm:$0xff] %vm38, %v37
  %s40 = scalar_lea.vmem %s0, 14
  %s41 = smov 3
  %v42 = vld [vmem:[%s40] ss:$16 sm:%s41]
  %s43 = scalar_lea.vmem %s0, 14
  %s44 = smov 12
  %v45 = vld [vmem:[%s43] ss:$16 sm:%s44]
  %vm46 = vcmask 1043458
  %v47 = vsel %vm46, %v45, %v42
  %s48 = scalar_lea.vmem %s0, 14
  %s49 = smov 48
  %v50 = vld [vmem:[%s48] ss:$16 sm:%s49]
  %vm51 = vcmask 1045508
  %v52 = vsel %vm51, %v50, %v47
  %s53 = scalar_lea.vmem %s0, 14
  %s54 = smov 192
  %v55 = vld [vmem:[%s53] ss:$16 sm:%s54]
  %vm56 = vcmask 1047558
  %v57 = vsel %vm56, %v55, %v52
  %58 = vrot.lane.b32.xlu0 %v57, 112
  %v59 = vpop.permute.xlu0 %58
  %vm60 = vcmask 982912
  %61 = vst.msk [vmem:[%s1] sm:$0xff] %vm60, %v59
  %s62 = scalar_lea.vmem %s0, 13
  %s63 = smov 3
  %v64 = vld [vmem:[%s62] ss:$16 sm:%s63]
  %s65 = scalar_lea.vmem %s0, 13
  %s66 = smov 12
  %v67 = vld [vmem:[%s65] ss:$16 sm:%s66]
  %vm68 = vcmask 1043458
  %v69 = vsel %vm68, %v67, %v64
  %s70 = scalar_lea.vmem %s0, 13
  %s71 = smov 48
  %v72 = vld [vmem:[%s70] ss:$16 sm:%s71]
  %vm73 = vcmask 1045508
  %v74 = vsel %vm73, %v72, %v69
  %s75 = scalar_lea.vmem %s0, 13
  %s76 = smov 192
  %v77 = vld [vmem:[%s75] ss:$16 sm:%s76]
  %vm78 = vcmask 1047558
  %v79 = vsel %vm78, %v77, %v74
  %80 = vrot.lane.b32.xlu0 %v79, 104
  %v81 = vpop.permute.xlu0 %80
  %vm82 = vcmask 917312
  %83 = vst.msk [vmem:[%s1] sm:$0xff] %vm82, %v81
  %s84 = scalar_lea.vmem %s0, 12
  %s85 = smov 3
  %v86 = vld [vmem:[%s84] ss:$16 sm:%s85]
  %s87 = scalar_lea.vmem %s0, 12
  %s88 = smov 12
  %v89 = vld [vmem:[%s87] ss:$16 sm:%s88]
  %vm90 = vcmask 1043458
  %v91 = vsel %vm90, %v89, %v86
  %s92 = scalar_lea.vmem %s0, 12
  %s93 = smov 48
  %v94 = vld [vmem:[%s92] ss:$16 sm:%s93]
  %vm95 = vcmask 1045508
  %v96 = vsel %vm95, %v94, %v91
  %s97 = scalar_lea.vmem %s0, 12
  %s98 = smov 192
  %v99 = vld [vmem:[%s97] ss:$16 sm:%s98]
  %vm100 = vcmask 1047558
  %v101 = vsel %vm100, %v99, %v96
  %102 = vrot.lane.b32.xlu0 %v101, 96
  %v103 = vpop.permute.xlu0 %102
  %vm104 = vcmask 851712
  %105 = vst.msk [vmem:[%s1] sm:$0xff] %vm104, %v103
  %s106 = scalar_lea.vmem %s0, 11
  %s107 = smov 3
  %v108 = vld [vmem:[%s106] ss:$16 sm:%s107]
  %s109 = scalar_lea.vmem %s0, 11
  %s110 = smov 12
  %v111 = vld [vmem:[%s109] ss:$16 sm:%s110]
  %vm112 = vcmask 1043458
  %v113 = vsel %vm112, %v111, %v108
  %s114 = scalar_lea.vmem %s0, 11
  %s115 = smov 48
  %v116 = vld [vmem:[%s114] ss:$16 sm:%s115]
  %vm117 = vcmask 1045508
  %v118 = vsel %vm117, %v116, %v113
  %s119 = scalar_lea.vmem %s0, 11
  %s120 = smov 192
  %v121 = vld [vmem:[%s119] ss:$16 sm:%s120]
  %vm122 = vcmask 1047558
  %v123 = vsel %vm122, %v121, %v118
  %124 = vrot.lane.b32.xlu0 %v123, 88
  %v125 = vpop.permute.xlu0 %124
  %vm126 = vcmask 786112
  %127 = vst.msk [vmem:[%s1] sm:$0xff] %vm126, %v125
  %s128 = scalar_lea.vmem %s0, 10
  %s129 = smov 3
  %v130 = vld [vmem:[%s128] ss:$16 sm:%s129]
  %s131 = scalar_lea.vmem %s0, 10
  %s132 = smov 12
  %v133 = vld [vmem:[%s131] ss:$16 sm:%s132]
  %vm134 = vcmask 1043458
  %v135 = vsel %vm134, %v133, %v130
  %s136 = scalar_lea.vmem %s0, 10
  %s137 = smov 48
  %v138 = vld [vmem:[%s136] ss:$16 sm:%s137]
  %vm139 = vcmask 1045508
  %v140 = vsel %vm139, %v138, %v135
  %s141 = scalar_lea.vmem %s0, 10
  %s142 = smov 192
  %v143 = vld [vmem:[%s141] ss:$16 sm:%s142]
  %vm144 = vcmask 1047558
  %v145 = vsel %vm144, %v143, %v140
  %146 = vrot.lane.b32.xlu0 %v145, 80
  %v147 = vpop.permute.xlu0 %146
  %vm148 = vcmask 720512
  %149 = vst.msk [vmem:[%s1] sm:$0xff] %vm148, %v147
  %s150 = scalar_lea.vmem %s0, 9
  %s151 = smov 3
  %v152 = vld [vmem:[%s150] ss:$16 sm:%s151]
  %s153 = scalar_lea.vmem %s0, 9
  %s154 = smov 12
  %v155 = vld [vmem:[%s153] ss:$16 sm:%s154]
  %vm156 = vcmask 1043458
  %v157 = vsel %vm156, %v155, %v152
  %s158 = scalar_lea.vmem %s0, 9
  %s159 = smov 48
  %v160 = vld [vmem:[%s158] ss:$16 sm:%s159]
  %vm161 = vcmask 1045508
  %v162 = vsel %vm161, %v160, %v157
  %s163 = scalar_lea.vmem %s0, 9
  %s164 = smov 192
  %v165 = vld [vmem:[%s163] ss:$16 sm:%s164]
  %vm166 = vcmask 1047558
  %v167 = vsel %vm166, %v165, %v162
  %168 = vrot.lane.b32.xlu0 %v167, 72
  %v169 = vpop.permute.xlu0 %168
  %vm170 = vcmask 654912
  %171 = vst.msk [vmem:[%s1] sm:$0xff] %vm170, %v169
  %s172 = scalar_lea.vmem %s0, 8
  %s173 = smov 3
  %v174 = vld [vmem:[%s172] ss:$16 sm:%s173]
  %s175 = scalar_lea.vmem %s0, 8
  %s176 = smov 12
  %v177 = vld [vmem:[%s175] ss:$16 sm:%s176]
  %vm178 = vcmask 1043458
  %v179 = vsel %vm178, %v177, %v174
  %s180 = scalar_lea.vmem %s0, 8
  %s181 = smov 48
  %v182 = vld [vmem:[%s180] ss:$16 sm:%s181]
  %vm183 = vcmask 1045508
  %v184 = vsel %vm183, %v182, %v179
  %s185 = scalar_lea.vmem %s0, 8
  %s186 = smov 192
  %v187 = vld [vmem:[%s185] ss:$16 sm:%s186]
  %vm188 = vcmask 1047558
  %v189 = vsel %vm188, %v187, %v184
  %190 = vrot.lane.b32.xlu0 %v189, 64
  %v191 = vpop.permute.xlu0 %190
  %vm192 = vcmask 589312
  %193 = vst.msk [vmem:[%s1] sm:$0xff] %vm192, %v191
  %s194 = scalar_lea.vmem %s0, 7
  %s195 = smov 3
  %v196 = vld [vmem:[%s194] ss:$16 sm:%s195]
  %s197 = scalar_lea.vmem %s0, 7
  %s198 = smov 12
  %v199 = vld [vmem:[%s197] ss:$16 sm:%s198]
  %vm200 = vcmask 1043458
  %v201 = vsel %vm200, %v199, %v196
  %s202 = scalar_lea.vmem %s0, 7
  %s203 = smov 48
  %v204 = vld [vmem:[%s202] ss:$16 sm:%s203]
  %vm205 = vcmask 1045508
  %v206 = vsel %vm205, %v204, %v201
  %s207 = scalar_lea.vmem %s0, 7
  %s208 = smov 192
  %v209 = vld [vmem:[%s207] ss:$16 sm:%s208]
  %vm210 = vcmask 1047558
  %v211 = vsel %vm210, %v209, %v206
  %212 = vrot.lane.b32.xlu0 %v211, 56
  %v213 = vpop.permute.xlu0 %212
  %vm214 = vcmask 523712
  %215 = vst.msk [vmem:[%s1] sm:$0xff] %vm214, %v213
  %s216 = scalar_lea.vmem %s0, 6
  %s217 = smov 3
  %v218 = vld [vmem:[%s216] ss:$16 sm:%s217]
  %s219 = scalar_lea.vmem %s0, 6
  %s220 = smov 12
  %v221 = vld [vmem:[%s219] ss:$16 sm:%s220]
  %vm222 = vcmask 1043458
  %v223 = vsel %vm222, %v221, %v218
  %s224 = scalar_lea.vmem %s0, 6
  %s225 = smov 48
  %v226 = vld [vmem:[%s224] ss:$16 sm:%s225]
  %vm227 = vcmask 1045508
  %v228 = vsel %vm227, %v226, %v223
  %s229 = scalar_lea.vmem %s0, 6
  %s230 = smov 192
  %v231 = vld [vmem:[%s229] ss:$16 sm:%s230]
  %vm232 = vcmask 1047558
  %v233 = vsel %vm232, %v231, %v228
  %234 = vrot.lane.b32.xlu0 %v233, 48
  %v235 = vpop.permute.xlu0 %234
  %vm236 = vcmask 458112
  %237 = vst.msk [vmem:[%s1] sm:$0xff] %vm236, %v235
  %s238 = scalar_lea.vmem %s0, 5
  %s239 = smov 3
  %v240 = vld [vmem:[%s238] ss:$16 sm:%s239]
  %s241 = scalar_lea.vmem %s0, 5
  %s242 = smov 12
  %v243 = vld [vmem:[%s241] ss:$16 sm:%s242]
  %vm244 = vcmask 1043458
  %v245 = vsel %vm244, %v243, %v240
  %s246 = scalar_lea.vmem %s0, 5
  %s247 = smov 48
  %v248 = vld [vmem:[%s246] ss:$16 sm:%s247]
  %vm249 = vcmask 1045508
  %v250 = vsel %vm249, %v248, %v245
  %s251 = scalar_lea.vmem %s0, 5
  %s252 = smov 192
  %v253 = vld [vmem:[%s251] ss:$16 sm:%s252]
  %vm254 = vcmask 1047558
  %v255 = vsel %vm254, %v253, %v250
  %256 = vrot.lane.b32.xlu0 %v255, 40
  %v257 = vpop.permute.xlu0 %256
  %vm258 = vcmask 392512
  %259 = vst.msk [vmem:[%s1] sm:$0xff] %vm258, %v257
  %s260 = scalar_lea.vmem %s0, 4
  %s261 = smov 3
  %v262 = vld [vmem:[%s260] ss:$16 sm:%s261]
  %s263 = scalar_lea.vmem %s0, 4
  %s264 = smov 12
  %v265 = vld [vmem:[%s263] ss:$16 sm:%s264]
  %vm266 = vcmask 1043458
  %v267 = vsel %vm266, %v265, %v262
  %s268 = scalar_lea.vmem %s0, 4
  %s269 = smov 48
  %v270 = vld [vmem:[%s268] ss:$16 sm:%s269]
  %vm271 = vcmask 1045508
  %v272 = vsel %vm271, %v270, %v267
  %s273 = scalar_lea.vmem %s0, 4
  %s274 = smov 192
  %v275 = vld [vmem:[%s273] ss:$16 sm:%s274]
  %vm276 = vcmask 1047558
  %v277 = vsel %vm276, %v275, %v272
  %278 = vrot.lane.b32.xlu0 %v277, 32
  %v279 = vpop.permute.xlu0 %278
  %vm280 = vcmask 326912
  %281 = vst.msk [vmem:[%s1] sm:$0xff] %vm280, %v279
  %s282 = scalar_lea.vmem %s0, 3
  %s283 = smov 3
  %v284 = vld [vmem:[%s282] ss:$16 sm:%s283]
  %s285 = scalar_lea.vmem %s0, 3
  %s286 = smov 12
  %v287 = vld [vmem:[%s285] ss:$16 sm:%s286]
  %vm288 = vcmask 1043458
  %v289 = vsel %vm288, %v287, %v284
  %s290 = scalar_lea.vmem %s0, 3
  %s291 = smov 48
  %v292 = vld [vmem:[%s290] ss:$16 sm:%s291]
  %vm293 = vcmask 1045508
  %v294 = vsel %vm293, %v292, %v289
  %s295 = scalar_lea.vmem %s0, 3
  %s296 = smov 192
  %v297 = vld [vmem:[%s295] ss:$16 sm:%s296]
  %vm298 = vcmask 1047558
  %v299 = vsel %vm298, %v297, %v294
  %300 = vrot.lane.b32.xlu0 %v299, 24
  %v301 = vpop.permute.xlu0 %300
  %vm302 = vcmask 261312
  %303 = vst.msk [vmem:[%s1] sm:$0xff] %vm302, %v301
  %s304 = scalar_lea.vmem %s0, 2
  %s305 = smov 3
  %v306 = vld [vmem:[%s304] ss:$16 sm:%s305]
  %s307 = scalar_lea.vmem %s0, 2
  %s308 = smov 12
  %v309 = vld [vmem:[%s307] ss:$16 sm:%s308]
  %vm310 = vcmask 1043458
  %v311 = vsel %vm310, %v309, %v306
  %s312 = scalar_lea.vmem %s0, 2
  %s313 = smov 48
  %v314 = vld [vmem:[%s312] ss:$16 sm:%s313]
  %vm315 = vcmask 1045508
  %v316 = vsel %vm315, %v314, %v311
  %s317 = scalar_lea.vmem %s0, 2
  %s318 = smov 192
  %v319 = vld [vmem:[%s317] ss:$16 sm:%s318]
  %vm320 = vcmask 1047558
  %v321 = vsel %vm320, %v319, %v316
  %322 = vrot.lane.b32.xlu0 %v321, 16
  %v323 = vpop.permute.xlu0 %322
  %vm324 = vcmask 195712
  %325 = vst.msk [vmem:[%s1] sm:$0xff] %vm324, %v323
  %s326 = scalar_lea.vmem %s0, 1
  %s327 = smov 3
  %v328 = vld [vmem:[%s326] ss:$16 sm:%s327]
  %s329 = scalar_lea.vmem %s0, 1
  %s330 = smov 12
  %v331 = vld [vmem:[%s329] ss:$16 sm:%s330]
  %vm332 = vcmask 1043458
  %v333 = vsel %vm332, %v331, %v328
  %s334 = scalar_lea.vmem %s0, 1
  %s335 = smov 48
  %v336 = vld [vmem:[%s334] ss:$16 sm:%s335]
  %vm337 = vcmask 1045508
  %v338 = vsel %vm337, %v336, %v333
  %s339 = scalar_lea.vmem %s0, 1
  %s340 = smov 192
  %v341 = vld [vmem:[%s339] ss:$16 sm:%s340]
  %vm342 = vcmask 1047558
  %v343 = vsel %vm342, %v341, %v338
  %344 = vrot.lane.b32.xlu0 %v343, 8
  %v345 = vpop.permute.xlu0 %344
  %vm346 = vcmask 130112
  %347 = vst.msk [vmem:[%s1] sm:$0xff] %vm346, %v345

// kernel: basic_block.1
$region0: #{basic_block.1}
  #allocation0 [shape = 'u32[]', space=smem, size = 0x4, offset = 0x4, fixed_abs, tag = 'smem constant byte address 0x4 - core index']
  #allocation1 [shape = 'u32[144,128]{1,0:T(1,128)}', space=vmem, size = 0x12000, scoped, tag = 'internal scratch']
  #allocation2 [shape = 'f32[2,32,128]{2,1,0:T(8,128)}', space=vmem, size = 0x8000, scoped, tag = 'scratch operand']
  %s0 = inlined_call_operand.vmem [shape: f32[32,128], index: 0, kind: input, shape index: {}]
  %s1 = inlined_call_operand.vmem [shape: f32[384,128], index: 1, kind: input, shape index: {}]
  %s2 = inlined_call_operand.vmem [shape: f32[384,128], index: 2, kind: input, shape index: {}]
  %s3 = inlined_call_operand.vmem [shape: f32[1,8], index: 3, kind: input, shape index: {}]
  %s4 = inlined_call_operand.vmem [shape: f32[1,8], index: 4, kind: input, shape index: {}]
  %s5 = inlined_call_operand.vmem [shape: f32[1,8], index: 5, kind: input, shape index: {}]
  %s6 = inlined_call_operand.vmem [shape: f32[1,8], index: 6, kind: input, shape index: {}]
  %s7 = inlined_call_operand.vmem [shape: f32[128,8], index: 7, kind: input, shape index: {}]
  %s8 = inlined_call_operand.vmem [shape: f32[8,128], index: 8, kind: input, shape index: {}]
  %s9 = inlined_call_operand.vmem [shape: f32[32,128], index: 9, kind: output, shape index: {}]
  %s10 = sld [smem:[#allocation0]]
  $region46: #{basic_block.1} parent=0
    _
  %s12 = ssub.s32 1, %s10
  %s13 = scalar_select 0, %s12, %s10
  // Predicated region
  $region2: #{basic_block.1} parent=0 // pred_check
    _
  $region3: #{basic_block.1} parent=0 // pred_check_branch
    %15 = sbr.rel (0) target = $region5
  $region4: #{basic_block.1} parent=0 // pred_region
    _
  $region5: #{basic_block.1} parent=0 // pred_fallthru
    _
  // Predicated region
  $region6: #{basic_block.1} parent=0 // pred_check
    _
  $region7: #{basic_block.1} parent=0 // pred_check_branch
    %17 = sbr.rel (0) target = $region9
  $region8: #{basic_block.1} parent=0 // pred_region
    _
  $region9: #{basic_block.1} parent=0 // pred_fallthru
    _
  // Predicated region
  $region10: #{basic_block.1} parent=0 // pred_check
    _
  $region11: #{basic_block.1} parent=0 // pred_check_branch
    %19 = sbr.rel (0) target = $region13
  $region12: #{basic_block.1} parent=0 // pred_region
    _
  $region13: #{basic_block.1} parent=0 // pred_fallthru
    _
  // Predicated region
  $region14: #{basic_block.1} parent=0 // pred_check
    _
  $region15: #{basic_block.1} parent=0 // pred_check_branch
    %21 = sbr.rel (0) target = $region17
  $region16: #{basic_block.1} parent=0 // pred_region
    _
  $region17: #{basic_block.1} parent=0 // pred_fallthru
    _
  // Predicated region
  $region18: #{basic_block.1} parent=0 // pred_check
    _
  $region19: #{basic_block.1} parent=0 // pred_check_branch
    %23 = sbr.rel (0) target = $region21
  $region20: #{basic_block.1} parent=0 // pred_region
    _
  $region21: #{basic_block.1} parent=0 // pred_fallthru
    _
  // Predicated region
  $region22: #{basic_block.1} parent=0 // pred_check
    _
  $region23: #{basic_block.1} parent=0 // pred_check_branch
    %25 = sbr.rel (0) target = $region25
  $region24: #{basic_block.1} parent=0 // pred_region
    _
  $region25: #{basic_block.1} parent=0 // pred_fallthru
    _
  // Predicated region
  $region26: #{basic_block.1} parent=0 // pred_check
    _
  $region27: #{basic_block.1} parent=0 // pred_check_branch
    %27 = sbr.rel (0) target = $region29
  $region28: #{basic_block.1} parent=0 // pred_region
    _
  $region29: #{basic_block.1} parent=0 // pred_fallthru
    _
  // Predicated region
  $region30: #{basic_block.1} parent=0 // pred_check
    _
  $region31: #{basic_block.1} parent=0 // pred_check_branch
    %29 = sbr.rel (0) target = $region33
  $region32: #{basic_block.1} parent=0 // pred_region
    _
  $region33: #{basic_block.1} parent=0 // pred_fallthru
    _
  // Predicated region
  $region34: #{basic_block.1} parent=0 // pred_check
    _
  $region35: #{basic_block.1} parent=0 // pred_check_branch
    %31 = sbr.rel (0) target = $region37
  $region36: #{basic_block.1} parent=0 // pred_region
    _
  $region37: #{basic_block.1} parent=0 // pred_fallthru
    _
  %v32 = vld [vmem:[%s7] sm:$0xff]
  %v33 = vld [vmem:[%s7 + $0x8] sm:$0xff]
  %v34 = vld [vmem:[%s7 + $0x10] sm:$0xff]
  %v35 = vld [vmem:[%s7 + $0x18] sm:$0xff]
  %v36 = vld [vmem:[%s7 + $0x20] sm:$0xff]
  %v37 = vld [vmem:[%s7 + $0x28] sm:$0xff]
  %v38 = vld [vmem:[%s7 + $0x30] sm:$0xff]
  %v39 = vld [vmem:[%s7 + $0x38] sm:$0xff]
  %v40 = vld [vmem:[%s7 + $0x40] sm:$0xff]
  %v41 = vld [vmem:[%s7 + $0x48] sm:$0xff]
  %v42 = vld [vmem:[%s7 + $0x50] sm:$0xff]
  %v43 = vld [vmem:[%s7 + $0x58] sm:$0xff]
  %v44 = vld [vmem:[%s7 + $0x60] sm:$0xff]
  %v45 = vld [vmem:[%s7 + $0x68] sm:$0xff]
  %v46 = vld [vmem:[%s7 + $0x70] sm:$0xff]
  %v47 = vld [vmem:[%s7 + $0x78] sm:$0xff]
  %v48 = vld [vmem:[%s8] sm:$0xff]
  %49 = vst [vmem:[#allocation2] sm:$0xff] 0.0
  %50 = vst [vmem:[#allocation2 + $0x20] sm:$0xff] 0.0
  %51 = vst [vmem:[#allocation2 + $0x18] sm:$0xff] 0.0
  %52 = vst [vmem:[#allocation2 + $0x38] sm:$0xff] 0.0
  %v53 = vld [vmem:[%s0] sm:$0xff]
  %v54 = vld [vmem:[%s0 + $0x8] sm:$0xff]
  %v55 = vld [vmem:[%s0 + $0x10] sm:$0xff]
  %v56 = vld [vmem:[%s0 + $0x18] sm:$0xff]
  %v57 = vld [vmem:[%s3] sm:$0x1]
  %v58 = vld [vmem:[%s4] sm:$0x1]
  %59 = vst [vmem:[#allocation2 + $0x8] sm:$0xff] %v53
  %60 = vst [vmem:[#allocation2 + $0x10] sm:$0xff] %v54
  %61 = vst [vmem:[#allocation2 + $0x28] sm:$0xff] %v55
  %62 = vst [vmem:[#allocation2 + $0x30] sm:$0xff] %v56
  %v63 = vld [vmem:[#allocation2 + $0x7] sm:$0xff]
  %v64 = vld [vmem:[#allocation2 + $0xf] sm:$0xff]
  %v65 = vld [vmem:[#allocation2 + $0x27] sm:$0xff]
  %v66 = vld [vmem:[#allocation2 + $0x2f] sm:$0xff]
  %v67 = vld [vmem:[#allocation2 + $0x8] sm:$0xff]
  %v68 = vld [vmem:[#allocation2 + $0x10] sm:$0xff]
  %v69 = vld [vmem:[#allocation2 + $0x28] sm:$0xff]
  %v70 = vld [vmem:[#allocation2 + $0x30] sm:$0xff]
  %v71 = vld [vmem:[#allocation2 + $0x9] sm:$0xff]
  %v72 = vld [vmem:[#allocation2 + $0x11] sm:$0xff]
  %v73 = vld [vmem:[#allocation2 + $0x29] sm:$0xff]
  %v74 = vld [vmem:[#allocation2 + $0x31] sm:$0xff]
  %v75 = vld [vmem:[%s1] sm:$0xff]
  %v76 = vld [vmem:[%s1 + $0x8] sm:$0xff]
  %v77 = vld [vmem:[%s1 + $0x10] sm:$0xff]
  %v78 = vld [vmem:[%s1 + $0x18] sm:$0xff]
  %v79 = vld [vmem:[%s1 + $0x20] sm:$0xff]
  %v80 = vld [vmem:[%s1 + $0x28] sm:$0xff]
  %v81 = vld [vmem:[%s1 + $0x30] sm:$0xff]
  %v82 = vld [vmem:[%s1 + $0x38] sm:$0xff]
  %v83 = vld [vmem:[%s1 + $0x40] sm:$0xff]
  %v84 = vld [vmem:[%s1 + $0x48] sm:$0xff]
  %v85 = vld [vmem:[%s1 + $0x50] sm:$0xff]
  %v86 = vld [vmem:[%s1 + $0x58] sm:$0xff]
  %v87 = vld [vmem:[%s1 + $0x60] sm:$0xff]
  %v88 = vld [vmem:[%s1 + $0x68] sm:$0xff]
  %v89 = vld [vmem:[%s1 + $0x70] sm:$0xff]
  %v90 = vld [vmem:[%s1 + $0x78] sm:$0xff]
  %v91 = vld [vmem:[%s1 + $0x80] sm:$0xff]
  %v92 = vld [vmem:[%s1 + $0x88] sm:$0xff]
  %v93 = vld [vmem:[%s1 + $0x90] sm:$0xff]
  %v94 = vld [vmem:[%s1 + $0x98] sm:$0xff]
  %v95 = vld [vmem:[%s1 + $0xa0] sm:$0xff]
  %v96 = vld [vmem:[%s1 + $0xa8] sm:$0xff]
  %v97 = vld [vmem:[%s1 + $0xb0] sm:$0xff]
  %v98 = vld [vmem:[%s1 + $0xb8] sm:$0xff]
  %v99 = vld [vmem:[%s1 + $0xc0] sm:$0xff]
  %v100 = vld [vmem:[%s1 + $0xc8] sm:$0xff]
  %v101 = vld [vmem:[%s1 + $0xd0] sm:$0xff]
  %v102 = vld [vmem:[%s1 + $0xd8] sm:$0xff]
  %v103 = vld [vmem:[%s1 + $0xe0] sm:$0xff]
  %v104 = vld [vmem:[%s1 + $0xe8] sm:$0xff]
  %v105 = vld [vmem:[%s1 + $0xf0] sm:$0xff]
  %v106 = vld [vmem:[%s1 + $0xf8] sm:$0xff]
  %v107 = vld [vmem:[%s1 + $0x100] sm:$0xff]
  %v108 = vld [vmem:[%s1 + $0x108] sm:$0xff]
  %v109 = vld [vmem:[%s1 + $0x110] sm:$0xff]
  %v110 = vld [vmem:[%s1 + $0x118] sm:$0xff]
  %v111 = vld [vmem:[%s1 + $0x120] sm:$0xff]
  %v112 = vld [vmem:[%s1 + $0x128] sm:$0xff]
  %v113 = vld [vmem:[%s1 + $0x130] sm:$0xff]
  %v114 = vld [vmem:[%s1 + $0x138] sm:$0xff]
  %v115 = vld [vmem:[%s1 + $0x140] sm:$0xff]
  %v116 = vld [vmem:[%s1 + $0x148] sm:$0xff]
  %v117 = vld [vmem:[%s1 + $0x150] sm:$0xff]
  %v118 = vld [vmem:[%s1 + $0x158] sm:$0xff]
  %v119 = vld [vmem:[%s1 + $0x160] sm:$0xff]
  %v120 = vld [vmem:[%s1 + $0x168] sm:$0xff]
  %v121 = vld [vmem:[%s1 + $0x170] sm:$0xff]
  %v122 = vld [vmem:[%s1 + $0x178] sm:$0xff]
  %123 = vmatprep.subr.mxu0 0.0
  %124 = vmatpush1.msra.mxu0 %v75
  %125 = vmatprep.subr.mxu0 0.0
  %126 = vmatpush1.msra.mxu0 %v76
  %127 = vmatprep.subr.mxu0 0.0
  %128 = vmatpush1.msra.mxu0 %v77
  %129 = vmatprep.subr.mxu0 0.0
  %130 = vmatpush1.msra.mxu0 %v78
  %131 = vmatprep.subr.mxu0 0.0
  %132 = vmatpush1.msra.mxu0 %v79
  %133 = vmatprep.subr.mxu0 0.0
  %134 = vmatpush1.msra.mxu0 %v80
  %135 = vmatprep.subr.mxu0 0.0
  %136 = vmatpush1.msra.mxu0 %v81
  %137 = vmatprep.subr.mxu0 0.0
  %138 = vmatpush1.msra.mxu0 %v82
  %139 = vmatprep.subr.mxu0 0.0
  %140 = vmatpush1.msra.mxu0 %v83
  %141 = vmatprep.subr.mxu0 0.0
  %142 = vmatpush1.msra.mxu0 %v84
  %143 = vmatprep.subr.mxu0 0.0
  %144 = vmatpush1.msra.mxu0 %v85
  %145 = vmatprep.subr.mxu0 0.0
  %146 = vmatpush1.msra.mxu0 %v86
  %147 = vmatprep.subr.mxu0 0.0
  %148 = vmatpush1.msra.mxu0 %v87
  %149 = vmatprep.subr.mxu0 0.0
  %150 = vmatpush1.msra.mxu0 %v88
  %151 = vmatprep.subr.mxu0 0.0
  %152 = vmatpush1.msra.mxu0 %v89
  %153 = vmatprep.subr.mxu0 0.0
  %154 = vmatpush1.msra.mxu0 %v90
  %155 = vmatprep.subr.mxu0 0.0
  %156 = vmatpush1.msra.mxu0 %v91
  %157 = vmatprep.subr.mxu0 0.0
  %158 = vmatpush1.msra.mxu0 %v92
  %159 = vmatprep.subr.mxu0 0.0
  %160 = vmatpush1.msra.mxu0 %v93
  %161 = vmatprep.subr.mxu0 0.0
  %162 = vmatpush1.msra.mxu0 %v94
  %163 = vmatprep.subr.mxu0 0.0
  %164 = vmatpush1.msra.mxu0 %v95
  %165 = vmatprep.subr.mxu0 0.0
  %166 = vmatpush1.msra.mxu0 %v96
  %167 = vmatprep.subr.mxu0 0.0
  %168 = vmatpush1.msra.mxu0 %v97
  %169 = vmatprep.subr.mxu0 0.0
  %170 = vmatpush1.msra.mxu0 %v98
  %171 = vmatprep.subr.mxu0 0.0
  %172 = vmatpush1.msra.mxu0 %v99
  %173 = vmatprep.subr.mxu0 0.0
  %174 = vmatpush1.msra.mxu0 %v100
  %175 = vmatprep.subr.mxu0 0.0
  %176 = vmatpush1.msra.mxu0 %v101
  %177 = vmatprep.subr.mxu0 0.0
  %178 = vmatpush1.msra.mxu0 %v102
  %179 = vmatprep.subr.mxu0 0.0
  %180 = vmatpush1.msra.mxu0 %v103
  %181 = vmatprep.subr.mxu0 0.0
  %182 = vmatpush1.msra.mxu0 %v104
  %183 = vmatprep.subr.mxu0 0.0
  %184 = vmatpush1.msra.mxu0 %v105
  %185 = vmatprep.subr.mxu0 0.0
  %186 = vmatpush1.msra.mxu0 %v106
  %187 = vmatprep.mubr.f32.mxu0 %v67
  %188 = vmatmul.mubr.f32.gmra.mrb[0].mxu0 %v63
  %v189 = vpop.f32.mrb[0].mxu0
  %v190 = vadd.f32 0.0, %v189
  %v191 = vpop.f32.mrb[0].mxu0
  %192 = vmatprep.mubr.f32.mxu0 %v68
  %193 = vmatmul.mubr.f32.gmra.mrb[0].mxu0 %v64
  %v194 = vpop.f32.mrb[0].mxu0
  %v195 = vadd.f32 0.0, %v194
  %v196 = vpop.f32.mrb[0].mxu0
  %197 = vmatprep.mubr.f32.mxu0 %v69
  %198 = vmatmul.mubr.f32.gmra.mrb[0].mxu0 %v65
  %v199 = vpop.f32.mrb[0].mxu0
  %v200 = vadd.f32 0.0, %v199
  %v201 = vpop.f32.mrb[0].mxu0
  %202 = vmatprep.mubr.f32.mxu0 %v70
  %203 = vmatmul.mubr.f32.gmra.mrb[0].mxu0 %v66
  %v204 = vpop.f32.mrb[0].mxu0
  %v205 = vadd.f32 0.0, %v204
  %v206 = vpop.f32.mrb[0].mxu0
  %207 = vdwg.mxu0
  %208 = vmatprep.subr.mxu0 0.0
  %209 = vmatpush1.msra.mxu0 %v107
  %210 = vmatprep.subr.mxu0 0.0
  %211 = vmatpush1.msra.mxu0 %v108
  %212 = vmatprep.subr.mxu0 0.0
  %213 = vmatpush1.msra.mxu0 %v109
  %214 = vmatprep.subr.mxu0 0.0
  %215 = vmatpush1.msra.mxu0 %v110
  %216 = vmatprep.subr.mxu0 0.0
  %217 = vmatpush1.msra.mxu0 %v111
  %218 = vmatprep.subr.mxu0 0.0
  %219 = vmatpush1.msra.mxu0 %v112
  %220 = vmatprep.subr.mxu0 0.0
  %221 = vmatpush1.msra.mxu0 %v113
  %222 = vmatprep.subr.mxu0 0.0
  %223 = vmatpush1.msra.mxu0 %v114
  %224 = vmatprep.subr.mxu0 0.0
  %225 = vmatpush1.msra.mxu0 %v115
  %226 = vmatprep.subr.mxu0 0.0
  %227 = vmatpush1.msra.mxu0 %v116
  %228 = vmatprep.subr.mxu0 0.0
  %229 = vmatpush1.msra.mxu0 %v117
  %230 = vmatprep.subr.mxu0 0.0
  %231 = vmatpush1.msra.mxu0 %v118
  %232 = vmatprep.subr.mxu0 0.0
  %233 = vmatpush1.msra.mxu0 %v119
  %234 = vmatprep.subr.mxu0 0.0
  %235 = vmatpush1.msra.mxu0 %v120
  %236 = vmatprep.subr.mxu0 0.0
  %237 = vmatpush1.msra.mxu0 %v121
  %238 = vmatprep.subr.mxu0 0.0
  %239 = vmatpush1.msra.mxu0 %v122
  %240 = vmatprep.subr.mxu0 0.0
  %241 = vmatpush1.msra.mxu0 0.0
  %242 = vmatprep.subr.mxu0 0.0
  %243 = vmatpush1.msra.mxu0 0.0
  %244 = vmatprep.subr.mxu0 0.0
  %245 = vmatpush1.msra.mxu0 0.0
  %246 = vmatprep.subr.mxu0 0.0
  %247 = vmatpush1.msra.mxu0 0.0
  %248 = vmatprep.subr.mxu0 0.0
  %249 = vmatpush1.msra.mxu0 0.0
  %250 = vmatprep.subr.mxu0 0.0
  %251 = vmatpush1.msra.mxu0 0.0
  %252 = vmatprep.subr.mxu0 0.0
  %253 = vmatpush1.msra.mxu0 0.0
  %254 = vmatprep.subr.mxu0 0.0
  %255 = vmatpush1.msra.mxu0 0.0
  %256 = vmatprep.subr.mxu0 0.0
  %257 = vmatpush1.msra.mxu0 0.0
  %258 = vmatprep.subr.mxu0 0.0
  %259 = vmatpush1.msra.mxu0 0.0
  %260 = vmatprep.subr.mxu0 0.0
  %261 = vmatpush1.msra.mxu0 0.0
  %262 = vmatprep.subr.mxu0 0.0
  %263 = vmatpush1.msra.mxu0 0.0
  %264 = vmatprep.subr.mxu0 0.0
  %265 = vmatpush1.msra.mxu0 0.0
  %266 = vmatprep.subr.mxu0 0.0
  %267 = vmatpush1.msra.mxu0 0.0
  %268 = vmatprep.subr.mxu0 0.0
  %269 = vmatpush1.msra.mxu0 0.0
  %270 = vmatprep.subr.mxu0 0.0
  %271 = vmatpush1.msra.mxu0 0.0
  %272 = vmatprep.mubr.f32.mxu0 0.0
  %273 = vmatmul.mubr.f32.gmra.mrb[0].mxu0 %v71
  %v274 = vpop.f32.mrb[0].mxu0
  %v275 = vadd.f32 %v190, %v274
  %v276 = vpop.f32.mrb[0].mxu0
  %277 = vmatprep.mubr.f32.mxu0 0.0
  %278 = vmatmul.mubr.f32.gmra.mrb[0].mxu0 %v72
  %v279 = vpop.f32.mrb[0].mxu0
  %v280 = vadd.f32 %v195, %v279
  %v281 = vpop.f32.mrb[0].mxu0
  %282 = vmatprep.mubr.f32.mxu0 0.0
  %283 = vmatmul.mubr.f32.gmra.mrb[0].mxu0 %v73
  %v284 = vpop.f32.mrb[0].mxu0
  %v285 = vadd.f32 %v200, %v284
  %v286 = vpop.f32.mrb[0].mxu0
  %287 = vmatprep.mubr.f32.mxu0 0.0
  %288 = vmatmul.mubr.f32.gmra.mrb[0].mxu0 %v74
  %v289 = vpop.f32.mrb[0].mxu0
  %v290 = vadd.f32 %v205, %v289
  %v291 = vpop.f32.mrb[0].mxu0
  %292 = vdwg.mxu0
  %v293 = vadd.f32 %v275, %v280
  %v294 = vadd.f32 %v293, %v285
  %v295 = vadd.f32 %v294, %v290
  %v296 = vrot.slane %v295, 4
  %v297 = vadd.f32 %v295, %v296
  %v298 = vrot.slane %v297, 2
  %v299 = vadd.f32 %v297, %v298
  %v300 = vrot.slane %v299, 1
  %v301 = vadd.f32 %v299, %v300
  %302 = vmatprep.subr.mxu0 0.0
  %303 = vmatpush1.msra.mxu0 %v32
  %304 = vmatprep.subr.mxu0 0.0
  %305 = vmatpush1.msra.mxu0 %v33
  %306 = vmatprep.subr.mxu0 0.0
  %307 = vmatpush1.msra.mxu0 %v34
  %308 = vmatprep.subr.mxu0 0.0
  %309 = vmatpush1.msra.mxu0 %v35
  %310 = vmatprep.subr.mxu0 0.0
  %311 = vmatpush1.msra.mxu0 %v36
  %312 = vmatprep.subr.mxu0 0.0
  %313 = vmatpush1.msra.mxu0 %v37
  %314 = vmatprep.subr.mxu0 0.0
  %315 = vmatpush1.msra.mxu0 %v38
  %316 = vmatprep.subr.mxu0 0.0
  %317 = vmatpush1.msra.mxu0 %v39
  %318 = vmatprep.subr.mxu0 0.0
  %319 = vmatpush1.msra.mxu0 %v40
  %320 = vmatprep.subr.mxu0 0.0
  %321 = vmatpush1.msra.mxu0 %v41
  %322 = vmatprep.subr.mxu0 0.0
  %323 = vmatpush1.msra.mxu0 %v42
  %324 = vmatprep.subr.mxu0 0.0
  %325 = vmatpush1.msra.mxu0 %v43
  %326 = vmatprep.subr.mxu0 0.0
  %327 = vmatpush1.msra.mxu0 %v44
  %328 = vmatprep.subr.mxu0 0.0
  %329 = vmatpush1.msra.mxu0 %v45
  %330 = vmatprep.subr.mxu0 0.0
  %331 = vmatpush1.msra.mxu0 %v46
  %332 = vmatprep.subr.mxu0 0.0
  %333 = vmatpush1.msra.mxu0 %v47
  %334 = vmatprep.subr.mxu0 0.0
  %335 = vmatpush1.msra.mxu0 0.0
  %336 = vmatprep.subr.mxu0 0.0
  %337 = vmatpush1.msra.mxu0 0.0
  %338 = vmatprep.subr.mxu0 0.0
  %339 = vmatpush1.msra.mxu0 0.0
  %340 = vmatprep.subr.mxu0 0.0
  %341 = vmatpush1.msra.mxu0 0.0
  %342 = vmatprep.subr.mxu0 0.0
  %343 = vmatpush1.msra.mxu0 0.0
  %344 = vmatprep.subr.mxu0 0.0
  %345 = vmatpush1.msra.mxu0 0.0
  %346 = vmatprep.subr.mxu0 0.0
  %347 = vmatpush1.msra.mxu0 0.0
  %348 = vmatprep.subr.mxu0 0.0
  %349 = vmatpush1.msra.mxu0 0.0
  %350 = vmatprep.subr.mxu0 0.0
  %351 = vmatpush1.msra.mxu0 0.0
  %352 = vmatprep.subr.mxu0 0.0
  %353 = vmatpush1.msra.mxu0 0.0
  %354 = vmatprep.subr.mxu0 0.0
  %355 = vmatpush1.msra.mxu0 0.0
  %356 = vmatprep.subr.mxu0 0.0
  %357 = vmatpush1.msra.mxu0 0.0
  %358 = vmatprep.subr.mxu0 0.0
  %359 = vmatpush1.msra.mxu0 0.0
  %360 = vmatprep.subr.mxu0 0.0
  %361 = vmatpush1.msra.mxu0 0.0
  %362 = vmatprep.subr.mxu0 0.0
  %363 = vmatpush1.msra.mxu0 0.0
  %364 = vmatprep.subr.mxu0 0.0
  %365 = vmatpush1.msra.mxu0 0.0
  %366 = vmatprep.mubr.f32.mxu0 0.0
  %367 = vmatmul.mubr.f32.gmra.mrb[0].mxu0 %v301
  %v368 = vpop.f32.mrb[0].mxu0
  %v369 = vadd.f32 0.0, %v368
  %v370 = vpop.f32.mrb[0].mxu0
  %371 = vdwg.mxu0
  %v372 = vmul.f32 %v369, 0.001953125
  %vm373 = vcmask 64512
  %v375 = vsel %vm373, %v372, 0
  %377 = vmatprep.subr.mxu0 0.0
  %378 = vmatpush1.msra.mxu0 %v48
  %379 = vmatprep.subr.mxu0 0.0
  %380 = vmatpush1.msra.mxu0 0.0
  %381 = vmatprep.subr.mxu0 0.0
  %382 = vmatpush1.msra.mxu0 0.0
  %383 = vmatprep.subr.mxu0 0.0
  %384 = vmatpush1.msra.mxu0 0.0
  %385 = vmatprep.subr.mxu0 0.0
  %386 = vmatpush1.msra.mxu0 0.0
  %387 = vmatprep.subr.mxu0 0.0
  %388 = vmatpush1.msra.mxu0 0.0
  %389 = vmatprep.subr.mxu0 0.0
  %390 = vmatpush1.msra.mxu0 0.0
  %391 = vmatprep.subr.mxu0 0.0
  %392 = vmatpush1.msra.mxu0 0.0
  %393 = vmatprep.subr.mxu0 0.0
  %394 = vmatpush1.msra.mxu0 0.0
  %395 = vmatprep.subr.mxu0 0.0
  %396 = vmatpush1.msra.mxu0 0.0
  %397 = vmatprep.subr.mxu0 0.0
  %398 = vmatpush1.msra.mxu0 0.0
  %399 = vmatprep.subr.mxu0 0.0
  %400 = vmatpush1.msra.mxu0 0.0
  %401 = vmatprep.subr.mxu0 0.0
  %402 = vmatpush1.msra.mxu0 0.0
  %403 = vmatprep.subr.mxu0 0.0
  %404 = vmatpush1.msra.mxu0 0.0
  %405 = vmatprep.subr.mxu0 0.0
  %406 = vmatpush1.msra.mxu0 0.0
  %407 = vmatprep.subr.mxu0 0.0
  %408 = vmatpush1.msra.mxu0 0.0
  %409 = vmatprep.subr.mxu0 0.0
  %410 = vmatpush1.msra.mxu0 0.0
  %411 = vmatprep.subr.mxu0 0.0
  %412 = vmatpush1.msra.mxu0 0.0
  %413 = vmatprep.subr.mxu0 0.0
  %414 = vmatpush1.msra.mxu0 0.0
  %415 = vmatprep.subr.mxu0 0.0
  %416 = vmatpush1.msra.mxu0 0.0
  %417 = vmatprep.subr.mxu0 0.0
  %418 = vmatpush1.msra.mxu0 0.0
  %419 = vmatprep.subr.mxu0 0.0
  %420 = vmatpush1.msra.mxu0 0.0
  %421 = vmatprep.subr.mxu0 0.0
  %422 = vmatpush1.msra.mxu0 0.0
  %423 = vmatprep.subr.mxu0 0.0
  %424 = vmatpush1.msra.mxu0 0.0
  %425 = vmatprep.subr.mxu0 0.0
  %426 = vmatpush1.msra.mxu0 0.0
  %427 = vmatprep.subr.mxu0 0.0
  %428 = vmatpush1.msra.mxu0 0.0
  %429 = vmatprep.subr.mxu0 0.0
  %430 = vmatpush1.msra.mxu0 0.0
  %431 = vmatprep.subr.mxu0 0.0
  %432 = vmatpush1.msra.mxu0 0.0
  %433 = vmatprep.subr.mxu0 0.0
  %434 = vmatpush1.msra.mxu0 0.0
  %435 = vmatprep.subr.mxu0 0.0
  %436 = vmatpush1.msra.mxu0 0.0
  %437 = vmatprep.subr.mxu0 0.0
  %438 = vmatpush1.msra.mxu0 0.0
  %439 = vmatprep.subr.mxu0 0.0
  %440 = vmatpush1.msra.mxu0 0.0
  %441 = vmatprep.mubr.f32.mxu0 0.0
  %442 = vmatmul.mubr.f32.gmra.mrb[0].mxu0 %v375
  %v443 = vpop.f32.mrb[0].mxu0
  %v444 = vadd.f32 0.0, %v443
  %v445 = vpop.f32.mrb[0].mxu0
  %446 = vdwg.mxu0
  %v447 = vlaneseq
  %v448 = vshrl.u32 %v447, 7
  %v449 = vsub.s32 0, %v448
  %v450 = vrot.slane %v444, %v449
  %v451 = vsub.f32 %v275, %v450
  %v452 = vsub.f32 %v280, %v450
  %v453 = vsub.f32 %v285, %v450
  %v454 = vsub.f32 %v290, %v450
  %v455 = vmul.f32 %v451, %v451
  %v456 = vmul.f32 %v452, %v452
  %v457 = vmul.f32 %v453, %v453
  %v458 = vmul.f32 %v454, %v454
  %v459 = vadd.f32 %v455, %v456
  %v460 = vadd.f32 %v459, %v457
  %v461 = vadd.f32 %v460, %v458
  %v462 = vrot.slane %v461, 4
  %v463 = vadd.f32 %v461, %v462
  %v464 = vrot.slane %v463, 2
  %v465 = vadd.f32 %v463, %v464
  %v466 = vrot.slane %v465, 1
  %v467 = vadd.f32 %v465, %v466
  %468 = vmatprep.subr.mxu0 0.0
  %469 = vmatpush1.msra.mxu0 %v32
  %470 = vmatprep.subr.mxu0 0.0
  %471 = vmatpush1.msra.mxu0 %v33
  %472 = vmatprep.subr.mxu0 0.0
  %473 = vmatpush1.msra.mxu0 %v34
  %474 = vmatprep.subr.mxu0 0.0
  %475 = vmatpush1.msra.mxu0 %v35
  %476 = vmatprep.subr.mxu0 0.0
  %477 = vmatpush1.msra.mxu0 %v36
  %478 = vmatprep.subr.mxu0 0.0
  %479 = vmatpush1.msra.mxu0 %v37
  %480 = vmatprep.subr.mxu0 0.0
  %481 = vmatpush1.msra.mxu0 %v38
  %482 = vmatprep.subr.mxu0 0.0
  %483 = vmatpush1.msra.mxu0 %v39
  %484 = vmatprep.subr.mxu0 0.0
  %485 = vmatpush1.msra.mxu0 %v40
  %486 = vmatprep.subr.mxu0 0.0
  %487 = vmatpush1.msra.mxu0 %v41
  %488 = vmatprep.subr.mxu0 0.0
  %489 = vmatpush1.msra.mxu0 %v42
  %490 = vmatprep.subr.mxu0 0.0
  %491 = vmatpush1.msra.mxu0 %v43
  %492 = vmatprep.subr.mxu0 0.0
  %493 = vmatpush1.msra.mxu0 %v44
  %494 = vmatprep.subr.mxu0 0.0
  %495 = vmatpush1.msra.mxu0 %v45
  %496 = vmatprep.subr.mxu0 0.0
  %497 = vmatpush1.msra.mxu0 %v46
  %498 = vmatprep.subr.mxu0 0.0
  %499 = vmatpush1.msra.mxu0 %v47
  %500 = vmatprep.subr.mxu0 0.0
  %501 = vmatpush1.msra.mxu0 0.0
  %502 = vmatprep.subr.mxu0 0.0
  %503 = vmatpush1.msra.mxu0 0.0
  %504 = vmatprep.subr.mxu0 0.0
  %505 = vmatpush1.msra.mxu0 0.0
  %506 = vmatprep.subr.mxu0 0.0
  %507 = vmatpush1.msra.mxu0 0.0
  %508 = vmatprep.subr.mxu0 0.0
  %509 = vmatpush1.msra.mxu0 0.0
  %510 = vmatprep.subr.mxu0 0.0
  %511 = vmatpush1.msra.mxu0 0.0
  %512 = vmatprep.subr.mxu0 0.0
  %513 = vmatpush1.msra.mxu0 0.0
  %514 = vmatprep.subr.mxu0 0.0
  %515 = vmatpush1.msra.mxu0 0.0
  %516 = vmatprep.subr.mxu0 0.0
  %517 = vmatpush1.msra.mxu0 0.0
  %518 = vmatprep.subr.mxu0 0.0
  %519 = vmatpush1.msra.mxu0 0.0
  %520 = vmatprep.subr.mxu0 0.0
  %521 = vmatpush1.msra.mxu0 0.0
  %522 = vmatprep.subr.mxu0 0.0
  %523 = vmatpush1.msra.mxu0 0.0
  %524 = vmatprep.subr.mxu0 0.0
  %525 = vmatpush1.msra.mxu0 0.0
  %526 = vmatprep.subr.mxu0 0.0
  %527 = vmatpush1.msra.mxu0 0.0
  %528 = vmatprep.subr.mxu0 0.0
  %529 = vmatpush1.msra.mxu0 0.0
  %530 = vmatprep.subr.mxu0 0.0
  %531 = vmatpush1.msra.mxu0 0.0
  %532 = vmatprep.mubr.f32.mxu0 0.0
  %533 = vmatmul.mubr.f32.gmra.mrb[0].mxu0 %v467
  %v534 = vpop.f32.mrb[0].mxu0
  %v535 = vadd.f32 0.0, %v534
  %v536 = vpop.f32.mrb[0].mxu0
  %537 = vdwg.mxu0
  %v538 = vmul.f32 %v535, 0.001953125
  %v539 = vadd.f32 %v538, 1e-05
  %v540 = vrsqrt.pop %v539
  %v541 = vmul.f32 %v57, %v540
  %v543 = vsel %vm373, %v541, 0
  %545 = vmatprep.subr.mxu0 0.0
  %546 = vmatpush1.msra.mxu0 %v48
  %547 = vmatprep.subr.mxu0 0.0
  %548 = vmatpush1.msra.mxu0 0.0
  %549 = vmatprep.subr.mxu0 0.0
  %550 = vmatpush1.msra.mxu0 0.0
  %551 = vmatprep.subr.mxu0 0.0
  %552 = vmatpush1.msra.mxu0 0.0
  %553 = vmatprep.subr.mxu0 0.0
  %554 = vmatpush1.msra.mxu0 0.0
  %555 = vmatprep.subr.mxu0 0.0
  %556 = vmatpush1.msra.mxu0 0.0
  %557 = vmatprep.subr.mxu0 0.0
  %558 = vmatpush1.msra.mxu0 0.0
  %559 = vmatprep.subr.mxu0 0.0
  %560 = vmatpush1.msra.mxu0 0.0
  %561 = vmatprep.subr.mxu0 0.0
  %562 = vmatpush1.msra.mxu0 0.0
  %563 = vmatprep.subr.mxu0 0.0
  %564 = vmatpush1.msra.mxu0 0.0
  %565 = vmatprep.subr.mxu0 0.0
  %566 = vmatpush1.msra.mxu0 0.0
  %567 = vmatprep.subr.mxu0 0.0
  %568 = vmatpush1.msra.mxu0 0.0
  %569 = vmatprep.subr.mxu0 0.0
  %570 = vmatpush1.msra.mxu0 0.0
  %571 = vmatprep.subr.mxu0 0.0
  %572 = vmatpush1.msra.mxu0 0.0
  %573 = vmatprep.subr.mxu0 0.0
  %574 = vmatpush1.msra.mxu0 0.0
  %575 = vmatprep.subr.mxu0 0.0
  %576 = vmatpush1.msra.mxu0 0.0
  %577 = vmatprep.subr.mxu0 0.0
  %578 = vmatpush1.msra.mxu0 0.0
  %579 = vmatprep.subr.mxu0 0.0
  %580 = vmatpush1.msra.mxu0 0.0
  %581 = vmatprep.subr.mxu0 0.0
  %582 = vmatpush1.msra.mxu0 0.0
  %583 = vmatprep.subr.mxu0 0.0
  %584 = vmatpush1.msra.mxu0 0.0
  %585 = vmatprep.subr.mxu0 0.0
  %586 = vmatpush1.msra.mxu0 0.0
  %587 = vmatprep.subr.mxu0 0.0
  %588 = vmatpush1.msra.mxu0 0.0
  %589 = vmatprep.subr.mxu0 0.0
  %590 = vmatpush1.msra.mxu0 0.0
  %591 = vmatprep.subr.mxu0 0.0
  %592 = vmatpush1.msra.mxu0 0.0
  %593 = vmatprep.subr.mxu0 0.0
  %594 = vmatpush1.msra.mxu0 0.0
  %595 = vmatprep.subr.mxu0 0.0
  %596 = vmatpush1.msra.mxu0 0.0
  %597 = vmatprep.subr.mxu0 0.0
  %598 = vmatpush1.msra.mxu0 0.0
  %599 = vmatprep.subr.mxu0 0.0
  %600 = vmatpush1.msra.mxu0 0.0
  %601 = vmatprep.subr.mxu0 0.0
  %602 = vmatpush1.msra.mxu0 0.0
  %603 = vmatprep.subr.mxu0 0.0
  %604 = vmatpush1.msra.mxu0 0.0
  %605 = vmatprep.subr.mxu0 0.0
  %606 = vmatpush1.msra.mxu0 0.0
  %607 = vmatprep.subr.mxu0 0.0
  %608 = vmatpush1.msra.mxu0 0.0
  %609 = vmatprep.mubr.f32.mxu0 0.0
  %610 = vmatmul.mubr.f32.gmra.mrb[0].mxu0 %v543
  %v611 = vpop.f32.mrb[0].mxu0
  %v612 = vadd.f32 0.0, %v611
  %v613 = vpop.f32.mrb[0].mxu0
  %614 = vdwg.mxu0
  %v616 = vsel %vm373, %v58, 0
  %618 = vmatprep.subr.mxu0 0.0
  %619 = vmatpush1.msra.mxu0 %v48
  %620 = vmatprep.subr.mxu0 0.0
  %621 = vmatpush1.msra.mxu0 0.0
  %622 = vmatprep.subr.mxu0 0.0
  %623 = vmatpush1.msra.mxu0 0.0
  %624 = vmatprep.subr.mxu0 0.0
  %625 = vmatpush1.msra.mxu0 0.0
  %626 = vmatprep.subr.mxu0 0.0
  %627 = vmatpush1.msra.mxu0 0.0
  %628 = vmatprep.subr.mxu0 0.0
  %629 = vmatpush1.msra.mxu0 0.0
  %630 = vmatprep.subr.mxu0 0.0
  %631 = vmatpush1.msra.mxu0 0.0
  %632 = vmatprep.subr.mxu0 0.0
  %633 = vmatpush1.msra.mxu0 0.0
  %634 = vmatprep.subr.mxu0 0.0
  %635 = vmatpush1.msra.mxu0 0.0
  %636 = vmatprep.subr.mxu0 0.0
  %637 = vmatpush1.msra.mxu0 0.0
  %638 = vmatprep.subr.mxu0 0.0
  %639 = vmatpush1.msra.mxu0 0.0
  %640 = vmatprep.subr.mxu0 0.0
  %641 = vmatpush1.msra.mxu0 0.0
  %642 = vmatprep.subr.mxu0 0.0
  %643 = vmatpush1.msra.mxu0 0.0
  %644 = vmatprep.subr.mxu0 0.0
  %645 = vmatpush1.msra.mxu0 0.0
  %646 = vmatprep.subr.mxu0 0.0
  %647 = vmatpush1.msra.mxu0 0.0
  %648 = vmatprep.subr.mxu0 0.0
  %649 = vmatpush1.msra.mxu0 0.0
  %650 = vmatprep.subr.mxu0 0.0
  %651 = vmatpush1.msra.mxu0 0.0
  %652 = vmatprep.subr.mxu0 0.0
  %653 = vmatpush1.msra.mxu0 0.0
  %654 = vmatprep.subr.mxu0 0.0
  %655 = vmatpush1.msra.mxu0 0.0
  %656 = vmatprep.subr.mxu0 0.0
  %657 = vmatpush1.msra.mxu0 0.0
  %658 = vmatprep.subr.mxu0 0.0
  %659 = vmatpush1.msra.mxu0 0.0
  %660 = vmatprep.subr.mxu0 0.0
  %661 = vmatpush1.msra.mxu0 0.0
  %662 = vmatprep.subr.mxu0 0.0
  %663 = vmatpush1.msra.mxu0 0.0
  %664 = vmatprep.subr.mxu0 0.0
  %665 = vmatpush1.msra.mxu0 0.0
  %666 = vmatprep.subr.mxu0 0.0
  %667 = vmatpush1.msra.mxu0 0.0
  %668 = vmatprep.subr.mxu0 0.0
  %669 = vmatpush1.msra.mxu0 0.0
  %670 = vmatprep.subr.mxu0 0.0
  %671 = vmatpush1.msra.mxu0 0.0
  %672 = vmatprep.subr.mxu0 0.0
  %673 = vmatpush1.msra.mxu0 0.0
  %674 = vmatprep.subr.mxu0 0.0
  %675 = vmatpush1.msra.mxu0 0.0
  %676 = vmatprep.subr.mxu0 0.0
  %677 = vmatpush1.msra.mxu0 0.0
  %678 = vmatprep.subr.mxu0 0.0
  %679 = vmatpush1.msra.mxu0 0.0
  %680 = vmatprep.subr.mxu0 0.0
  %681 = vmatpush1.msra.mxu0 0.0
  %682 = vmatprep.mubr.f32.mxu0 0.0
  %683 = vmatmul.mubr.f32.gmra.mrb[0].mxu0 %v616
  %v684 = vpop.f32.mrb[0].mxu0
  %v685 = vadd.f32 0.0, %v684
  %v686 = vpop.f32.mrb[0].mxu0
  %687 = vdwg.mxu0
  %v688 = vlaneseq
  %v689 = vshrl.u32 %v688, 7
  %v690 = vsub.s32 0, %v689
  %v691 = vrot.slane %v612, %v690
  %v692 = vmul.f32 %v451, %v691
  %v693 = vmul.f32 %v452, %v691
  %v694 = vmul.f32 %v453, %v691
  %v695 = vmul.f32 %v454, %v691
  %v696 = vlaneseq
  %v697 = vshrl.u32 %v696, 7
  %v698 = vsub.s32 0, %v697
  %v699 = vrot.slane %v685, %v698
  %v700 = vadd.f32 %v692, %v699
  %v701 = vadd.f32 %v693, %v699
  %v702 = vadd.f32 %v694, %v699
  %v703 = vadd.f32 %v695, %v699
  %v704 = vmax.f32 %v700, 0.0
  %v705 = vmax.f32 %v701, 0.0
  %v706 = vmax.f32 %v702, 0.0
  %v707 = vmax.f32 %v703, 0.0
  %v708 = vld [vmem:[%s5] sm:$0x1]
  %v709 = vld [vmem:[%s6] sm:$0x1]
  %710 = vst [vmem:[#allocation2 + $0x8] sm:$0xff] %v704
  %711 = vst [vmem:[#allocation2 + $0x10] sm:$0xff] %v705
  %712 = vst [vmem:[#allocation2 + $0x28] sm:$0xff] %v706
  %713 = vst [vmem:[#allocation2 + $0x30] sm:$0xff] %v707
  %v714 = vld [vmem:[#allocation2 + $0x7] sm:$0xff]
  %v715 = vld [vmem:[#allocation2 + $0xf] sm:$0xff]
  %v716 = vld [vmem:[#allocation2 + $0x27] sm:$0xff]
  %v717 = vld [vmem:[#allocation2 + $0x2f] sm:$0xff]
  %v718 = vld [vmem:[#allocation2 + $0x8] sm:$0xff]
  %v719 = vld [vmem:[#allocation2 + $0x10] sm:$0xff]
  %v720 = vld [vmem:[#allocation2 + $0x28] sm:$0xff]
  %v721 = vld [vmem:[#allocation2 + $0x30] sm:$0xff]
  %v722 = vld [vmem:[#allocation2 + $0x9] sm:$0xff]
  %v723 = vld [vmem:[#allocation2 + $0x11] sm:$0xff]
  %v724 = vld [vmem:[#allocation2 + $0x29] sm:$0xff]
  %v725 = vld [vmem:[#allocation2 + $0x31] sm:$0xff]
  %v726 = vld [vmem:[%s2] sm:$0xff]
  %v727 = vld [vmem:[%s2 + $0x8] sm:$0xff]
  %v728 = vld [vmem:[%s2 + $0x10] sm:$0xff]
  %v729 = vld [vmem:[%s2 + $0x18] sm:$0xff]
  %v730 = vld [vmem:[%s2 + $0x20] sm:$0xff]
  %v731 = vld [vmem:[%s2 + $0x28] sm:$0xff]
  %v732 = vld [vmem:[%s2 + $0x30] sm:$0xff]
  %v733 = vld [vmem:[%s2 + $0x38] sm:$0xff]
  %v734 = vld [vmem:[%s2 + $0x40] sm:$0xff]
  %v735 = vld [vmem:[%s2 + $0x48] sm:$0xff]
  %v736 = vld [vmem:[%s2 + $0x50] sm:$0xff]
  %v737 = vld [vmem:[%s2 + $0x58] sm:$0xff]
  %v738 = vld [vmem:[%s2 + $0x60] sm:$0xff]
  %v739 = vld [vmem:[%s2 + $0x68] sm:$0xff]
  %v740 = vld [vmem:[%s2 + $0x70] sm:$0xff]
  %v741 = vld [vmem:[%s2 + $0x78] sm:$0xff]
  %v742 = vld [vmem:[%s2 + $0x80] sm:$0xff]
  %v743 = vld [vmem:[%s2 + $0x88] sm:$0xff]
  %v744 = vld [vmem:[%s2 + $0x90] sm:$0xff]
  %v745 = vld [vmem:[%s2 + $0x98] sm:$0xff]
  %v746 = vld [vmem:[%s2 + $0xa0] sm:$0xff]
  %v747 = vld [vmem:[%s2 + $0xa8] sm:$0xff]
  %v748 = vld [vmem:[%s2 + $0xb0] sm:$0xff]
  %v749 = vld [vmem:[%s2 + $0xb8] sm:$0xff]
  %v750 = vld [vmem:[%s2 + $0xc0] sm:$0xff]
  %v751 = vld [vmem:[%s2 + $0xc8] sm:$0xff]
  %v752 = vld [vmem:[%s2 + $0xd0] sm:$0xff]
  %v753 = vld [vmem:[%s2 + $0xd8] sm:$0xff]
  %v754 = vld [vmem:[%s2 + $0xe0] sm:$0xff]
  %v755 = vld [vmem:[%s2 + $0xe8] sm:$0xff]
  %v756 = vld [vmem:[%s2 + $0xf0] sm:$0xff]
  %v757 = vld [vmem:[%s2 + $0xf8] sm:$0xff]
  %v758 = vld [vmem:[%s2 + $0x100] sm:$0xff]
  %v759 = vld [vmem:[%s2 + $0x108] sm:$0xff]
  %v760 = vld [vmem:[%s2 + $0x110] sm:$0xff]
  %v761 = vld [vmem:[%s2 + $0x118] sm:$0xff]
  %v762 = vld [vmem:[%s2 + $0x120] sm:$0xff]
  %v763 = vld [vmem:[%s2 + $0x128] sm:$0xff]
  %v764 = vld [vmem:[%s2 + $0x130] sm:$0xff]
  %v765 = vld [vmem:[%s2 + $0x138] sm:$0xff]
  %v766 = vld [vmem:[%s2 + $0x140] sm:$0xff]
  %v767 = vld [vmem:[%s2 + $0x148] sm:$0xff]
  %v768 = vld [vmem:[%s2 + $0x150] sm:$0xff]
  %v769 = vld [vmem:[%s2 + $0x158] sm:$0xff]
  %v770 = vld [vmem:[%s2 + $0x160] sm:$0xff]
  %v771 = vld [vmem:[%s2 + $0x168] sm:$0xff]
  %v772 = vld [vmem:[%s2 + $0x170] sm:$0xff]
  %v773 = vld [vmem:[%s2 + $0x178] sm:$0xff]
  %774 = vmatprep.subr.mxu0 0.0
  %775 = vmatpush1.msra.mxu0 %v726
  %776 = vmatprep.subr.mxu0 0.0
  %777 = vmatpush1.msra.mxu0 %v727
  %778 = vmatprep.subr.mxu0 0.0
  %779 = vmatpush1.msra.mxu0 %v728
  %780 = vmatprep.subr.mxu0 0.0
  %781 = vmatpush1.msra.mxu0 %v729
  %782 = vmatprep.subr.mxu0 0.0
  %783 = vmatpush1.msra.mxu0 %v730
  %784 = vmatprep.subr.mxu0 0.0
  %785 = vmatpush1.msra.mxu0 %v731
  %786 = vmatprep.subr.mxu0 0.0
  %787 = vmatpush1.msra.mxu0 %v732
  %788 = vmatprep.subr.mxu0 0.0
  %789 = vmatpush1.msra.mxu0 %v733
  %790 = vmatprep.subr.mxu0 0.0
  %791 = vmatpush1.msra.mxu0 %v734
  %792 = vmatprep.subr.mxu0 0.0
  %793 = vmatpush1.msra.mxu0 %v735
  %794 = vmatprep.subr.mxu0 0.0
  %795 = vmatpush1.msra.mxu0 %v736
  %796 = vmatprep.subr.mxu0 0.0
  %797 = vmatpush1.msra.mxu0 %v737
  %798 = vmatprep.subr.mxu0 0.0
  %799 = vmatpush1.msra.mxu0 %v738
  %800 = vmatprep.subr.mxu0 0.0
  %801 = vmatpush1.msra.mxu0 %v739
  %802 = vmatprep.subr.mxu0 0.0
  %803 = vmatpush1.msra.mxu0 %v740
  %804 = vmatprep.subr.mxu0 0.0
  %805 = vmatpush1.msra.mxu0 %v741
  %806 = vmatprep.subr.mxu0 0.0
  %807 = vmatpush1.msra.mxu0 %v742
  %808 = vmatprep.subr.mxu0 0.0
  %809 = vmatpush1.msra.mxu0 %v743
  %810 = vmatprep.subr.mxu0 0.0
  %811 = vmatpush1.msra.mxu0 %v744
  %812 = vmatprep.subr.mxu0 0.0
  %813 = vmatpush1.msra.mxu0 %v745
  %814 = vmatprep.subr.mxu0 0.0
  %815 = vmatpush1.msra.mxu0 %v746
  %816 = vmatprep.subr.mxu0 0.0
  %817 = vmatpush1.msra.mxu0 %v747
  %818 = vmatprep.subr.mxu0 0.0
  %819 = vmatpush1.msra.mxu0 %v748
  %820 = vmatprep.subr.mxu0 0.0
  %821 = vmatpush1.msra.mxu0 %v749
  %822 = vmatprep.subr.mxu0 0.0
  %823 = vmatpush1.msra.mxu0 %v750
  %824 = vmatprep.subr.mxu0 0.0
  %825 = vmatpush1.msra.mxu0 %v751
  %826 = vmatprep.subr.mxu0 0.0
  %827 = vmatpush1.msra.mxu0 %v752
  %828 = vmatprep.subr.mxu0 0.0
  %829 = vmatpush1.msra.mxu0 %v753
  %830 = vmatprep.subr.mxu0 0.0
  %831 = vmatpush1.msra.mxu0 %v754
  %832 = vmatprep.subr.mxu0 0.0
  %833 = vmatpush1.msra.mxu0 %v755
  %834 = vmatprep.subr.mxu0 0.0
  %835 = vmatpush1.msra.mxu0 %v756
  %836 = vmatprep.subr.mxu0 0.0
  %837 = vmatpush1.msra.mxu0 %v757
  %838 = vmatprep.mubr.f32.mxu0 %v718
  %839 = vmatmul.mubr.f32.gmra.mrb[0].mxu0 %v714
  %v840 = vpop.f32.mrb[0].mxu0
  %v841 = vadd.f32 0.0, %v840
  %v842 = vpop.f32.mrb[0].mxu0
  %843 = vmatprep.mubr.f32.mxu0 %v719
  %844 = vmatmul.mubr.f32.gmra.mrb[0].mxu0 %v715
  %v845 = vpop.f32.mrb[0].mxu0
  %v846 = vadd.f32 0.0, %v845
  %v847 = vpop.f32.mrb[0].mxu0
  %848 = vmatprep.mubr.f32.mxu0 %v720
  %849 = vmatmul.mubr.f32.gmra.mrb[0].mxu0 %v716
  %v850 = vpop.f32.mrb[0].mxu0
  %v851 = vadd.f32 0.0, %v850
  %v852 = vpop.f32.mrb[0].mxu0
  %853 = vmatprep.mubr.f32.mxu0 %v721
  %854 = vmatmul.mubr.f32.gmra.mrb[0].mxu0 %v717
  %v855 = vpop.f32.mrb[0].mxu0
  %v856 = vadd.f32 0.0, %v855
  %v857 = vpop.f32.mrb[0].mxu0
  %858 = vdwg.mxu0
  %859 = vmatprep.subr.mxu0 0.0
  %860 = vmatpush1.msra.mxu0 %v758
  %861 = vmatprep.subr.mxu0 0.0
  %862 = vmatpush1.msra.mxu0 %v759
  %863 = vmatprep.subr.mxu0 0.0
  %864 = vmatpush1.msra.mxu0 %v760
  %865 = vmatprep.subr.mxu0 0.0
  %866 = vmatpush1.msra.mxu0 %v761
  %867 = vmatprep.subr.mxu0 0.0
  %868 = vmatpush1.msra.mxu0 %v762
  %869 = vmatprep.subr.mxu0 0.0
  %870 = vmatpush1.msra.mxu0 %v763
  %871 = vmatprep.subr.mxu0 0.0
  %872 = vmatpush1.msra.mxu0 %v764
  %873 = vmatprep.subr.mxu0 0.0
  %874 = vmatpush1.msra.mxu0 %v765
  %875 = vmatprep.subr.mxu0 0.0
  %876 = vmatpush1.msra.mxu0 %v766
  %877 = vmatprep.subr.mxu0 0.0
  %878 = vmatpush1.msra.mxu0 %v767
  %879 = vmatprep.subr.mxu0 0.0
  %880 = vmatpush1.msra.mxu0 %v768
  %881 = vmatprep.subr.mxu0 0.0
  %882 = vmatpush1.msra.mxu0 %v769
  %883 = vmatprep.subr.mxu0 0.0
  %884 = vmatpush1.msra.mxu0 %v770
  %885 = vmatprep.subr.mxu0 0.0
  %886 = vmatpush1.msra.mxu0 %v771
  %887 = vmatprep.subr.mxu0 0.0
  %888 = vmatpush1.msra.mxu0 %v772
  %889 = vmatprep.subr.mxu0 0.0
  %890 = vmatpush1.msra.mxu0 %v773
  %891 = vmatprep.subr.mxu0 0.0
  %892 = vmatpush1.msra.mxu0 0.0
  %893 = vmatprep.subr.mxu0 0.0
  %894 = vmatpush1.msra.mxu0 0.0
  %895 = vmatprep.subr.mxu0 0.0
  %896 = vmatpush1.msra.mxu0 0.0
  %897 = vmatprep.subr.mxu0 0.0
  %898 = vmatpush1.msra.mxu0 0.0
  %899 = vmatprep.subr.mxu0 0.0
  %900 = vmatpush1.msra.mxu0 0.0
  %901 = vmatprep.subr.mxu0 0.0
  %902 = vmatpush1.msra.mxu0 0.0
  %903 = vmatprep.subr.mxu0 0.0
  %904 = vmatpush1.msra.mxu0 0.0
  %905 = vmatprep.subr.mxu0 0.0
  %906 = vmatpush1.msra.mxu0 0.0
  %907 = vmatprep.subr.mxu0 0.0
  %908 = vmatpush1.msra.mxu0 0.0
  %909 = vmatprep.subr.mxu0 0.0
  %910 = vmatpush1.msra.mxu0 0.0
  %911 = vmatprep.subr.mxu0 0.0
  %912 = vmatpush1.msra.mxu0 0.0
  %913 = vmatprep.subr.mxu0 0.0
  %914 = vmatpush1.msra.mxu0 0.0
  %915 = vmatprep.subr.mxu0 0.0
  %916 = vmatpush1.msra.mxu0 0.0
  %917 = vmatprep.subr.mxu0 0.0
  %918 = vmatpush1.msra.mxu0 0.0
  %919 = vmatprep.subr.mxu0 0.0
  %920 = vmatpush1.msra.mxu0 0.0
  %921 = vmatprep.subr.mxu0 0.0
  %922 = vmatpush1.msra.mxu0 0.0
  %923 = vmatprep.mubr.f32.mxu0 0.0
  %924 = vmatmul.mubr.f32.gmra.mrb[0].mxu0 %v722
  %v925 = vpop.f32.mrb[0].mxu0
  %v926 = vadd.f32 %v841, %v925
  %v927 = vpop.f32.mrb[0].mxu0
  %928 = vmatprep.mubr.f32.mxu0 0.0
  %929 = vmatmul.mubr.f32.gmra.mrb[0].mxu0 %v723
  %v930 = vpop.f32.mrb[0].mxu0
  %v931 = vadd.f32 %v846, %v930
  %v932 = vpop.f32.mrb[0].mxu0
  %933 = vmatprep.mubr.f32.mxu0 0.0
  %934 = vmatmul.mubr.f32.gmra.mrb[0].mxu0 %v724
  %v935 = vpop.f32.mrb[0].mxu0
  %v936 = vadd.f32 %v851, %v935
  %v937 = vpop.f32.mrb[0].mxu0
  %938 = vmatprep.mubr.f32.mxu0 0.0
  %939 = vmatmul.mubr.f32.gmra.mrb[0].mxu0 %v725
  %v940 = vpop.f32.mrb[0].mxu0
  %v941 = vadd.f32 %v856, %v940
  %v942 = vpop.f32.mrb[0].mxu0
  %943 = vdwg.mxu0
  %v944 = vadd.f32 %v926, %v931
  %v945 = vadd.f32 %v944, %v936
  %v946 = vadd.f32 %v945, %v941
  %v947 = vrot.slane %v946, 4
  %v948 = vadd.f32 %v946, %v947
  %v949 = vrot.slane %v948, 2
  %v950 = vadd.f32 %v948, %v949
  %v951 = vrot.slane %v950, 1
  %v952 = vadd.f32 %v950, %v951
  %953 = vmatprep.subr.mxu0 0.0
  %954 = vmatpush1.msra.mxu0 %v32
  %955 = vmatprep.subr.mxu0 0.0
  %956 = vmatpush1.msra.mxu0 %v33
  %957 = vmatprep.subr.mxu0 0.0
  %958 = vmatpush1.msra.mxu0 %v34
  %959 = vmatprep.subr.mxu0 0.0
  %960 = vmatpush1.msra.mxu0 %v35
  %961 = vmatprep.subr.mxu0 0.0
  %962 = vmatpush1.msra.mxu0 %v36
  %963 = vmatprep.subr.mxu0 0.0
  %964 = vmatpush1.msra.mxu0 %v37
  %965 = vmatprep.subr.mxu0 0.0
  %966 = vmatpush1.msra.mxu0 %v38
  %967 = vmatprep.subr.mxu0 0.0
  %968 = vmatpush1.msra.mxu0 %v39
  %969 = vmatprep.subr.mxu0 0.0
  %970 = vmatpush1.msra.mxu0 %v40
  %971 = vmatprep.subr.mxu0 0.0
  %972 = vmatpush1.msra.mxu0 %v41
  %973 = vmatprep.subr.mxu0 0.0
  %974 = vmatpush1.msra.mxu0 %v42
  %975 = vmatprep.subr.mxu0 0.0
  %976 = vmatpush1.msra.mxu0 %v43
  %977 = vmatprep.subr.mxu0 0.0
  %978 = vmatpush1.msra.mxu0 %v44
  %979 = vmatprep.subr.mxu0 0.0
  %980 = vmatpush1.msra.mxu0 %v45
  %981 = vmatprep.subr.mxu0 0.0
  %982 = vmatpush1.msra.mxu0 %v46
  %983 = vmatprep.subr.mxu0 0.0
  %984 = vmatpush1.msra.mxu0 %v47
  %985 = vmatprep.subr.mxu0 0.0
  %986 = vmatpush1.msra.mxu0 0.0
  %987 = vmatprep.subr.mxu0 0.0
  %988 = vmatpush1.msra.mxu0 0.0
  %989 = vmatprep.subr.mxu0 0.0
  %990 = vmatpush1.msra.mxu0 0.0
  %991 = vmatprep.subr.mxu0 0.0
  %992 = vmatpush1.msra.mxu0 0.0
  %993 = vmatprep.subr.mxu0 0.0
  %994 = vmatpush1.msra.mxu0 0.0
  %995 = vmatprep.subr.mxu0 0.0
  %996 = vmatpush1.msra.mxu0 0.0
  %997 = vmatprep.subr.mxu0 0.0
  %998 = vmatpush1.msra.mxu0 0.0
  %999 = vmatprep.subr.mxu0 0.0
  %1000 = vmatpush1.msra.mxu0 0.0
  %1001 = vmatprep.subr.mxu0 0.0
  %1002 = vmatpush1.msra.mxu0 0.0
  %1003 = vmatprep.subr.mxu0 0.0
  %1004 = vmatpush1.msra.mxu0 0.0
  %1005 = vmatprep.subr.mxu0 0.0
  %1006 = vmatpush1.msra.mxu0 0.0
  %1007 = vmatprep.subr.mxu0 0.0
  %1008 = vmatpush1.msra.mxu0 0.0
  %1009 = vmatprep.subr.mxu0 0.0
  %1010 = vmatpush1.msra.mxu0 0.0
  %1011 = vmatprep.subr.mxu0 0.0
  %1012 = vmatpush1.msra.mxu0 0.0
  %1013 = vmatprep.subr.mxu0 0.0
  %1014 = vmatpush1.msra.mxu0 0.0
  %1015 = vmatprep.subr.mxu0 0.0
  %1016 = vmatpush1.msra.mxu0 0.0
  %1017 = vmatprep.mubr.f32.mxu0 0.0
  %1018 = vmatmul.mubr.f32.gmra.mrb[0].mxu0 %v952
  %v1019 = vpop.f32.mrb[0].mxu0
  %v1020 = vadd.f32 0.0, %v1019
  %v1021 = vpop.f32.mrb[0].mxu0
  %1022 = vdwg.mxu0
  %v1023 = vmul.f32 %v1020, 0.001953125
  %v1025 = vsel %vm373, %v1023, 0
  %1027 = vmatprep.subr.mxu0 0.0
  %1028 = vmatpush1.msra.mxu0 %v48
  %1029 = vmatprep.subr.mxu0 0.0
  %1030 = vmatpush1.msra.mxu0 0.0
  %1031 = vmatprep.subr.mxu0 0.0
  %1032 = vmatpush1.msra.mxu0 0.0
  %1033 = vmatprep.subr.mxu0 0.0
  %1034 = vmatpush1.msra.mxu0 0.0
  %1035 = vmatprep.subr.mxu0 0.0
  %1036 = vmatpush1.msra.mxu0 0.0
  %1037 = vmatprep.subr.mxu0 0.0
  %1038 = vmatpush1.msra.mxu0 0.0
  %1039 = vmatprep.subr.mxu0 0.0
  %1040 = vmatpush1.msra.mxu0 0.0
  %1041 = vmatprep.subr.mxu0 0.0
  %1042 = vmatpush1.msra.mxu0 0.0
  %1043 = vmatprep.subr.mxu0 0.0
  %1044 = vmatpush1.msra.mxu0 0.0
  %1045 = vmatprep.subr.mxu0 0.0
  %1046 = vmatpush1.msra.mxu0 0.0
  %1047 = vmatprep.subr.mxu0 0.0
  %1048 = vmatpush1.msra.mxu0 0.0
  %1049 = vmatprep.subr.mxu0 0.0
  %1050 = vmatpush1.msra.mxu0 0.0
  %1051 = vmatprep.subr.mxu0 0.0
  %1052 = vmatpush1.msra.mxu0 0.0
  %1053 = vmatprep.subr.mxu0 0.0
  %1054 = vmatpush1.msra.mxu0 0.0
  %1055 = vmatprep.subr.mxu0 0.0
  %1056 = vmatpush1.msra.mxu0 0.0
  %1057 = vmatprep.subr.mxu0 0.0
  %1058 = vmatpush1.msra.mxu0 0.0
  %1059 = vmatprep.subr.mxu0 0.0
  %1060 = vmatpush1.msra.mxu0 0.0
  %1061 = vmatprep.subr.mxu0 0.0
  %1062 = vmatpush1.msra.mxu0 0.0
  %1063 = vmatprep.subr.mxu0 0.0
  %1064 = vmatpush1.msra.mxu0 0.0
  %1065 = vmatprep.subr.mxu0 0.0
  %1066 = vmatpush1.msra.mxu0 0.0
  %1067 = vmatprep.subr.mxu0 0.0
  %1068 = vmatpush1.msra.mxu0 0.0
  %1069 = vmatprep.subr.mxu0 0.0
  %1070 = vmatpush1.msra.mxu0 0.0
  %1071 = vmatprep.subr.mxu0 0.0
  %1072 = vmatpush1.msra.mxu0 0.0
  %1073 = vmatprep.subr.mxu0 0.0
  %1074 = vmatpush1.msra.mxu0 0.0
  %1075 = vmatprep.subr.mxu0 0.0
  %1076 = vmatpush1.msra.mxu0 0.0
  %1077 = vmatprep.subr.mxu0 0.0
  %1078 = vmatpush1.msra.mxu0 0.0
  %1079 = vmatprep.subr.mxu0 0.0
  %1080 = vmatpush1.msra.mxu0 0.0
  %1081 = vmatprep.subr.mxu0 0.0
  %1082 = vmatpush1.msra.mxu0 0.0
  %1083 = vmatprep.subr.mxu0 0.0
  %1084 = vmatpush1.msra.mxu0 0.0
  %1085 = vmatprep.subr.mxu0 0.0
  %1086 = vmatpush1.msra.mxu0 0.0
  %1087 = vmatprep.subr.mxu0 0.0
  %1088 = vmatpush1.msra.mxu0 0.0
  %1089 = vmatprep.subr.mxu0 0.0
  %1090 = vmatpush1.msra.mxu0 0.0
  %1091 = vmatprep.mubr.f32.mxu0 0.0
  %1092 = vmatmul.mubr.f32.gmra.mrb[0].mxu0 %v1025
  %v1093 = vpop.f32.mrb[0].mxu0
  %v1094 = vadd.f32 0.0, %v1093
  %v1095 = vpop.f32.mrb[0].mxu0
  %1096 = vdwg.mxu0
  %v1097 = vlaneseq
  %v1098 = vshrl.u32 %v1097, 7
  %v1099 = vsub.s32 0, %v1098
  %v1100 = vrot.slane %v1094, %v1099
  %v1101 = vsub.f32 %v926, %v1100
  %v1102 = vsub.f32 %v931, %v1100
  %v1103 = vsub.f32 %v936, %v1100
  %v1104 = vsub.f32 %v941, %v1100
  %v1105 = vmul.f32 %v1101, %v1101
  %v1106 = vmul.f32 %v1102, %v1102
  %v1107 = vmul.f32 %v1103, %v1103
  %v1108 = vmul.f32 %v1104, %v1104
  %v1109 = vadd.f32 %v1105, %v1106
  %v1110 = vadd.f32 %v1109, %v1107
  %v1111 = vadd.f32 %v1110, %v1108
  %v1112 = vrot.slane %v1111, 4
  %v1113 = vadd.f32 %v1111, %v1112
  %v1114 = vrot.slane %v1113, 2
  %v1115 = vadd.f32 %v1113, %v1114
  %v1116 = vrot.slane %v1115, 1
  %v1117 = vadd.f32 %v1115, %v1116
  %1118 = vmatprep.subr.mxu0 0.0
  %1119 = vmatpush1.msra.mxu0 %v32
  %1120 = vmatprep.subr.mxu0 0.0
  %1121 = vmatpush1.msra.mxu0 %v33
  %1122 = vmatprep.subr.mxu0 0.0
  %1123 = vmatpush1.msra.mxu0 %v34
  %1124 = vmatprep.subr.mxu0 0.0
  %1125 = vmatpush1.msra.mxu0 %v35
  %1126 = vmatprep.subr.mxu0 0.0
  %1127 = vmatpush1.msra.mxu0 %v36
  %1128 = vmatprep.subr.mxu0 0.0
  %1129 = vmatpush1.msra.mxu0 %v37
  %1130 = vmatprep.subr.mxu0 0.0
  %1131 = vmatpush1.msra.mxu0 %v38
  %1132 = vmatprep.subr.mxu0 0.0
  %1133 = vmatpush1.msra.mxu0 %v39
  %1134 = vmatprep.subr.mxu0 0.0
  %1135 = vmatpush1.msra.mxu0 %v40
  %1136 = vmatprep.subr.mxu0 0.0
  %1137 = vmatpush1.msra.mxu0 %v41
  %1138 = vmatprep.subr.mxu0 0.0
  %1139 = vmatpush1.msra.mxu0 %v42
  %1140 = vmatprep.subr.mxu0 0.0
  %1141 = vmatpush1.msra.mxu0 %v43
  %1142 = vmatprep.subr.mxu0 0.0
  %1143 = vmatpush1.msra.mxu0 %v44
  %1144 = vmatprep.subr.mxu0 0.0
  %1145 = vmatpush1.msra.mxu0 %v45
  %1146 = vmatprep.subr.mxu0 0.0
  %1147 = vmatpush1.msra.mxu0 %v46
  %1148 = vmatprep.subr.mxu0 0.0
  %1149 = vmatpush1.msra.mxu0 %v47
  %1150 = vmatprep.subr.mxu0 0.0
  %1151 = vmatpush1.msra.mxu0 0.0
  %1152 = vmatprep.subr.mxu0 0.0
  %1153 = vmatpush1.msra.mxu0 0.0
  %1154 = vmatprep.subr.mxu0 0.0
  %1155 = vmatpush1.msra.mxu0 0.0
  %1156 = vmatprep.subr.mxu0 0.0
  %1157 = vmatpush1.msra.mxu0 0.0
  %1158 = vmatprep.subr.mxu0 0.0
  %1159 = vmatpush1.msra.mxu0 0.0
  %1160 = vmatprep.subr.mxu0 0.0
  %1161 = vmatpush1.msra.mxu0 0.0
  %1162 = vmatprep.subr.mxu0 0.0
  %1163 = vmatpush1.msra.mxu0 0.0
  %1164 = vmatprep.subr.mxu0 0.0
  %1165 = vmatpush1.msra.mxu0 0.0
  %1166 = vmatprep.subr.mxu0 0.0
  %1167 = vmatpush1.msra.mxu0 0.0
  %1168 = vmatprep.subr.mxu0 0.0
  %1169 = vmatpush1.msra.mxu0 0.0
  %1170 = vmatprep.subr.mxu0 0.0
  %1171 = vmatpush1.msra.mxu0 0.0
  %1172 = vmatprep.subr.mxu0 0.0
  %1173 = vmatpush1.msra.mxu0 0.0
  %1174 = vmatprep.subr.mxu0 0.0
  %1175 = vmatpush1.msra.mxu0 0.0
  %1176 = vmatprep.subr.mxu0 0.0
  %1177 = vmatpush1.msra.mxu0 0.0
  %1178 = vmatprep.subr.mxu0 0.0
  %1179 = vmatpush1.msra.mxu0 0.0
  %1180 = vmatprep.subr.mxu0 0.0
  %1181 = vmatpush1.msra.mxu0 0.0
  %1182 = vmatprep.mubr.f32.mxu0 0.0
  %1183 = vmatmul.mubr.f32.gmra.mrb[0].mxu0 %v1117
  %v1184 = vpop.f32.mrb[0].mxu0
  %v1185 = vadd.f32 0.0, %v1184
  %v1186 = vpop.f32.mrb[0].mxu0
  %1187 = vdwg.mxu0
  %v1188 = vmul.f32 %v1185, 0.001953125
  %v1189 = vadd.f32 %v1188, 1e-05
  %v1190 = vrsqrt.pop %v1189
  %v1191 = vmul.f32 %v708, %v1190
  %v1193 = vsel %vm373, %v1191, 0
  %1195 = vmatprep.subr.mxu0 0.0
  %1196 = vmatpush1.msra.mxu0 %v48
  %1197 = vmatprep.subr.mxu0 0.0
  %1198 = vmatpush1.msra.mxu0 0.0
  %1199 = vmatprep.subr.mxu0 0.0
  %1200 = vmatpush1.msra.mxu0 0.0
  %1201 = vmatprep.subr.mxu0 0.0
  %1202 = vmatpush1.msra.mxu0 0.0
  %1203 = vmatprep.subr.mxu0 0.0
  %1204 = vmatpush1.msra.mxu0 0.0
  %1205 = vmatprep.subr.mxu0 0.0
  %1206 = vmatpush1.msra.mxu0 0.0
  %1207 = vmatprep.subr.mxu0 0.0
  %1208 = vmatpush1.msra.mxu0 0.0
  %1209 = vmatprep.subr.mxu0 0.0
  %1210 = vmatpush1.msra.mxu0 0.0
  %1211 = vmatprep.subr.mxu0 0.0
  %1212 = vmatpush1.msra.mxu0 0.0
  %1213 = vmatprep.subr.mxu0 0.0
  %1214 = vmatpush1.msra.mxu0 0.0
  %1215 = vmatprep.subr.mxu0 0.0
  %1216 = vmatpush1.msra.mxu0 0.0
  %1217 = vmatprep.subr.mxu0 0.0
  %1218 = vmatpush1.msra.mxu0 0.0
  %1219 = vmatprep.subr.mxu0 0.0
  %1220 = vmatpush1.msra.mxu0 0.0
  %1221 = vmatprep.subr.mxu0 0.0
  %1222 = vmatpush1.msra.mxu0 0.0
  %1223 = vmatprep.subr.mxu0 0.0
  %1224 = vmatpush1.msra.mxu0 0.0
  %1225 = vmatprep.subr.mxu0 0.0
  %1226 = vmatpush1.msra.mxu0 0.0
  %1227 = vmatprep.subr.mxu0 0.0
  %1228 = vmatpush1.msra.mxu0 0.0
  %1229 = vmatprep.subr.mxu0 0.0
  %1230 = vmatpush1.msra.mxu0 0.0
  %1231 = vmatprep.subr.mxu0 0.0
  %1232 = vmatpush1.msra.mxu0 0.0
  %1233 = vmatprep.subr.mxu0 0.0
  %1234 = vmatpush1.msra.mxu0 0.0
  %1235 = vmatprep.subr.mxu0 0.0
  %1236 = vmatpush1.msra.mxu0 0.0
  %1237 = vmatprep.subr.mxu0 0.0
  %1238 = vmatpush1.msra.mxu0 0.0
  %1239 = vmatprep.subr.mxu0 0.0
  %1240 = vmatpush1.msra.mxu0 0.0
  %1241 = vmatprep.subr.mxu0 0.0
  %1242 = vmatpush1.msra.mxu0 0.0
  %1243 = vmatprep.subr.mxu0 0.0
  %1244 = vmatpush1.msra.mxu0 0.0
  %1245 = vmatprep.subr.mxu0 0.0
  %1246 = vmatpush1.msra.mxu0 0.0
  %1247 = vmatprep.subr.mxu0 0.0
  %1248 = vmatpush1.msra.mxu0 0.0
  %1249 = vmatprep.subr.mxu0 0.0
  %1250 = vmatpush1.msra.mxu0 0.0
  %1251 = vmatprep.subr.mxu0 0.0
  %1252 = vmatpush1.msra.mxu0 0.0
  %1253 = vmatprep.subr.mxu0 0.0
  %1254 = vmatpush1.msra.mxu0 0.0
  %1255 = vmatprep.subr.mxu0 0.0
  %1256 = vmatpush1.msra.mxu0 0.0
  %1257 = vmatprep.subr.mxu0 0.0
  %1258 = vmatpush1.msra.mxu0 0.0
  %1259 = vmatprep.mubr.f32.mxu0 0.0
  %1260 = vmatmul.mubr.f32.gmra.mrb[0].mxu0 %v1193
  %v1261 = vpop.f32.mrb[0].mxu0
  %v1262 = vadd.f32 0.0, %v1261
  %v1263 = vpop.f32.mrb[0].mxu0
  %1264 = vdwg.mxu0
  %v1266 = vsel %vm373, %v709, 0
  %1268 = vmatprep.subr.mxu0 0.0
  %1269 = vmatpush1.msra.mxu0 %v48
  %1270 = vmatprep.subr.mxu0 0.0
  %1271 = vmatpush1.msra.mxu0 0.0
  %1272 = vmatprep.subr.mxu0 0.0
  %1273 = vmatpush1.msra.mxu0 0.0
  %1274 = vmatprep.subr.mxu0 0.0
  %1275 = vmatpush1.msra.mxu0 0.0
  %1276 = vmatprep.subr.mxu0 0.0
  %1277 = vmatpush1.msra.mxu0 0.0
  %1278 = vmatprep.subr.mxu0 0.0
  %1279 = vmatpush1.msra.mxu0 0.0
  %1280 = vmatprep.subr.mxu0 0.0
  %1281 = vmatpush1.msra.mxu0 0.0
  %1282 = vmatprep.subr.mxu0 0.0
  %1283 = vmatpush1.msra.mxu0 0.0
  %1284 = vmatprep.subr.mxu0 0.0
  %1285 = vmatpush1.msra.mxu0 0.0
  %1286 = vmatprep.subr.mxu0 0.0
  %1287 = vmatpush1.msra.mxu0 0.0
  %1288 = vmatprep.subr.mxu0 0.0
  %1289 = vmatpush1.msra.mxu0 0.0
  %1290 = vmatprep.subr.mxu0 0.0
  %1291 = vmatpush1.msra.mxu0 0.0
  %1292 = vmatprep.subr.mxu0 0.0
  %1293 = vmatpush1.msra.mxu0 0.0
  %1294 = vmatprep.subr.mxu0 0.0
  %1295 = vmatpush1.msra.mxu0 0.0
  %1296 = vmatprep.subr.mxu0 0.0
  %1297 = vmatpush1.msra.mxu0 0.0
  %1298 = vmatprep.subr.mxu0 0.0
  %1299 = vmatpush1.msra.mxu0 0.0
  %1300 = vmatprep.subr.mxu0 0.0
  %1301 = vmatpush1.msra.mxu0 0.0
  %1302 = vmatprep.subr.mxu0 0.0
  %1303 = vmatpush1.msra.mxu0 0.0
  %1304 = vmatprep.subr.mxu0 0.0
  %1305 = vmatpush1.msra.mxu0 0.0
  %1306 = vmatprep.subr.mxu0 0.0
  %1307 = vmatpush1.msra.mxu0 0.0
  %1308 = vmatprep.subr.mxu0 0.0
  %1309 = vmatpush1.msra.mxu0 0.0
  %1310 = vmatprep.subr.mxu0 0.0
  %1311 = vmatpush1.msra.mxu0 0.0
  %1312 = vmatprep.subr.mxu0 0.0
  %1313 = vmatpush1.msra.mxu0 0.0
  %1314 = vmatprep.subr.mxu0 0.0
  %1315 = vmatpush1.msra.mxu0 0.0
  %1316 = vmatprep.subr.mxu0 0.0
  %1317 = vmatpush1.msra.mxu0 0.0
  %1318 = vmatprep.subr.mxu0 0.0
  %1319 = vmatpush1.msra.mxu0 0.0
  %1320 = vmatprep.subr.mxu0 0.0
  %1321 = vmatpush1.msra.mxu0 0.0
  %1322 = vmatprep.subr.mxu0 0.0
  %1323 = vmatpush1.msra.mxu0 0.0
  %1324 = vmatprep.subr.mxu0 0.0
  %1325 = vmatpush1.msra.mxu0 0.0
  %1326 = vmatprep.subr.mxu0 0.0
  %1327 = vmatpush1.msra.mxu0 0.0
  %1328 = vmatprep.subr.mxu0 0.0
  %1329 = vmatpush1.msra.mxu0 0.0
  %1330 = vmatprep.subr.mxu0 0.0
  %1331 = vmatpush1.msra.mxu0 0.0
  %1332 = vmatprep.mubr.f32.mxu0 0.0
  %1333 = vmatmul.mubr.f32.gmra.mrb[0].mxu0 %v1266
  %v1334 = vpop.f32.mrb[0].mxu0
  %v1335 = vadd.f32 0.0, %v1334
  %v1336 = vpop.f32.mrb[0].mxu0
  %1337 = vdwg.mxu0
  %v1338 = vlaneseq
  %v1339 = vshrl.u32 %v1338, 7
  %v1340 = vsub.s32 0, %v1339
  %v1341 = vrot.slane %v1262, %v1340
  %v1342 = vmul.f32 %v1101, %v1341
  %v1343 = vmul.f32 %v1102, %v1341
  %v1344 = vmul.f32 %v1103, %v1341
  %v1345 = vmul.f32 %v1104, %v1341
  %v1346 = vlaneseq
  %v1347 = vshrl.u32 %v1346, 7
  %v1348 = vsub.s32 0, %v1347
  %v1349 = vrot.slane %v1335, %v1348
  %v1350 = vadd.f32 %v1342, %v1349
  %v1351 = vadd.f32 %v1343, %v1349
  %v1352 = vadd.f32 %v1344, %v1349
  %v1353 = vadd.f32 %v1345, %v1349
  %v1354 = vld [vmem:[%s0] sm:$0xff]
  %v1355 = vld [vmem:[%s0 + $0x8] sm:$0xff]
  %v1356 = vld [vmem:[%s0 + $0x10] sm:$0xff]
  %v1357 = vld [vmem:[%s0 + $0x18] sm:$0xff]
  %v1358 = vadd.f32 %v1350, %v1354
  %v1359 = vadd.f32 %v1351, %v1355
  %v1360 = vadd.f32 %v1352, %v1356
  %v1361 = vadd.f32 %v1353, %v1357
  %v1362 = vmax.f32 %v1358, 0.0
  %v1363 = vmax.f32 %v1359, 0.0
  %v1364 = vmax.f32 %v1360, 0.0
  %v1365 = vmax.f32 %v1361, 0.0
  %1366 = vst [vmem:[%s9] sm:$0xff] %v1362
  %1367 = vst [vmem:[%s9 + $0x8] sm:$0xff] %v1363
  %1368 = vst [vmem:[%s9 + $0x10] sm:$0xff] %v1364
  %1369 = vst [vmem:[%s9 + $0x18] sm:$0xff] %v1365
  // Predicated region
  $region38: #{basic_block.1} parent=0 // pred_check
    _
  $region39: #{basic_block.1} parent=0 // pred_check_branch
    %1371 = sbr.rel (0) target = $region41
  $region40: #{basic_block.1} parent=0 // pred_region
    _
  $region41: #{basic_block.1} parent=0 // pred_fallthru
    _
  // Predicated region
  $region42: #{basic_block.1} parent=0 // pred_check
    _
  $region43: #{basic_block.1} parent=0 // pred_check_branch
    %1373 = sbr.rel (0) target = $region45
  $region44: #{basic_block.1} parent=0 // pred_region
    _
  $region45: #{basic_block.1} parent=0 // pred_fallthru
    _

</llo_original>
